<compile_context>
chip_gen: v7x
topology: tpu7x:2x2x1
jax: 0.10.0
libtpu: 0.0.40
codegen_flags: <defaults>
</compile_context>

<pallas_src>
import functools
import math

import jax
import jax.numpy as jnp
from jax import lax
from jax.experimental import pallas as pl
from jax.experimental.pallas import tpu as pltpu

_LN_EPS = 1e-5
_INV_SQRT2 = 1.0 / math.sqrt(2.0)
_MATMUL_DTYPE = jnp.bfloat16          # MXU input dtype; accumulation is f32.
_VMEM_LIMIT_BYTES = 48 * 1024 * 1024  # headroom on v7x (64 MiB), < v5e/v6e phys.


# ------------------------------ math helpers --------------------------------

def _gelu_exact(h):
    # nn.GELU() default: exact erf formulation (EUP slot; effectively free).
    return 0.5 * h * (1.0 + lax.erf(h * _INV_SQRT2))


def _ln_last(h, gamma, beta):
    """LayerNorm over the last (lane) axis; biased variance like torch LN."""
    mu = jnp.mean(h, axis=-1, keepdims=True)
    var = jnp.mean((h - mu) ** 2, axis=-1, keepdims=True)
    return (h - mu) * lax.rsqrt(var + _LN_EPS) * gamma + beta


def _ln_first(h, gamma, beta):
    """LayerNorm over the first (sublane) axis; biased variance."""
    mu = jnp.mean(h, axis=0, keepdims=True)
    var = jnp.mean((h - mu) ** 2, axis=0, keepdims=True)
    return (h - mu) * lax.rsqrt(var + _LN_EPS) * gamma + beta


# ------------------------------ kernels --------------------------------------

def _mlp_rows_kernel(x_ref, w1_ref, p1_ref, w2_ref, p2_ref, w3_ref, p3_ref,
                     o_ref, *, add_residual, matmul_dtype):
    """Fused (Linear->LN->GELU)x2 -> Linear->LN [+input residual], rows = samples.

    p*_ref pack (bias, gamma, beta) as rows of a (3, d) array.
    """
    x = x_ref[...]

    def mm(a, w_ref):
        return jnp.dot(a.astype(matmul_dtype), w_ref[...],
                       preferred_element_type=jnp.float32)

    h = mm(x, w1_ref) + p1_ref[0:1, :]
    h = _gelu_exact(_ln_last(h, p1_ref[1:2, :], p1_ref[2:3, :]))
    h = mm(h, w2_ref) + p2_ref[0:1, :]
    h = _gelu_exact(_ln_last(h, p2_ref[1:2, :], p2_ref[2:3, :]))
    h = mm(h, w3_ref) + p3_ref[0:1, :]
    h = _ln_last(h, p3_ref[1:2, :], p3_ref[2:3, :])
    if add_residual:
        h = h + x.astype(jnp.float32)
    o_ref[...] = h.astype(o_ref.dtype)


def _mlp_cols_kernel(x_ref, w1t_ref, p1_ref, w2t_ref, p2_ref, w3t_ref, p3_ref,
                     o_ref, *, add_residual, matmul_dtype):
    """Same fused block, but the mixed feature axis is the SUBLANE axis.

    x_ref is (num_tok, tile_d): lanes carry the model dim, so net_tok needs no
    transposes and all stores are lane-dense.  w*t_ref are pre-transposed
    weights; p*_ref pack (bias, gamma, beta) as columns of a (d, 3) array so
    they broadcast along lanes.
    """
    x = x_ref[...]

    def mm(wt_ref, a):
        return jnp.dot(wt_ref[...], a.astype(matmul_dtype),
                       preferred_element_type=jnp.float32)

    h = mm(w1t_ref, x) + p1_ref[:, 0:1]
    h = _gelu_exact(_ln_first(h, p1_ref[:, 1:2], p1_ref[:, 2:3]))
    h = mm(w2t_ref, h) + p2_ref[:, 0:1]
    h = _gelu_exact(_ln_first(h, p2_ref[:, 1:2], p2_ref[:, 2:3]))
    h = mm(w3t_ref, h) + p3_ref[:, 0:1]
    h = _ln_first(h, p3_ref[:, 1:2], p3_ref[:, 2:3])
    if add_residual:
        h = h + x.astype(jnp.float32)
    o_ref[...] = h.astype(o_ref.dtype)


# ------------------------------ spec helpers ---------------------------------

def _const_spec(shape, n_grid_axes, single_buffer):
    """BlockSpec for an input whose block index never changes across the grid."""
    zeros = (0,) * len(shape)
    if n_grid_axes == 1:
        index_map = lambda i: zeros
    else:
        index_map = lambda i, j: zeros
    if single_buffer:
        # Constant-index inputs don't need double buffering -> halve their VMEM.
        return pl.BlockSpec(shape, index_map, pipeline_mode=pl.Buffered(1))
    return pl.BlockSpec(shape, index_map)


def _pick_tile_m(M, f32_bytes_per_row, budget_bytes=24 * 1024 * 1024):
    """Largest power-of-two row tile whose live f32 footprint fits the budget."""
    tile = 1024
    while tile > 8 and tile * f32_bytes_per_row > budget_bytes:
        tile //= 2
    return min(tile, M)   # either a multiple of 8 or the full extent M


# ------------------------------ block wrappers -------------------------------

def mlp_block_rows(x2d, block_params, *, add_residual, tile_m=None):
    """net_sen-style block on a (M, d_in) view, tiled over M."""
    (w1, b1, g1, be1, w2, b2, g2, be2, w3, b3, g3, be3) = block_params
    M, d_in = x2d.shape
    hidden = w1.shape[1]
    d_out = w3.shape[1]
    if add_residual and d_in != d_out:
        raise ValueError("residual requires d_in == d_out")

    # bf16 MXU inputs; LN/bias params stay f32 and are packed per layer.
    w1m = w1.astype(_MATMUL_DTYPE)
    w2m = w2.astype(_MATMUL_DTYPE)
    w3m = w3.astype(_MATMUL_DTYPE)
    p1 = jnp.concatenate([b1, g1, be1], axis=0).astype(jnp.float32)   # (3, hidden)
    p2 = jnp.concatenate([b2, g2, be2], axis=0).astype(jnp.float32)   # (3, hidden)
    p3 = jnp.concatenate([b3, g3, be3], axis=0).astype(jnp.float32)   # (3, d_out)

    if tile_m is None:
        # Rough live f32 bytes per row: x + out (double buffered) + a few
        # hidden-wide temps. Keeps tiles a few MiB even on v7x (64 MiB VMEM).
        f32_bytes_per_row = 4 * (2 * d_in + 3 * hidden + 2 * d_out)
        tile_m = _pick_tile_m(M, f32_bytes_per_row)
    grid = (pl.cdiv(M, tile_m),)   # tail tile handled by Pallas OOB masking

    kernel = functools.partial(_mlp_rows_kernel, add_residual=add_residual,
                               matmul_dtype=_MATMUL_DTYPE)
    consts = (w1m, p1, w2m, p2, w3m, p3)

    def run(single_buffer_weights):
        in_specs = [pl.BlockSpec((tile_m, d_in), lambda i: (i, 0))]
        in_specs += [_const_spec(a.shape, 1, single_buffer_weights) for a in consts]
        return pl.pallas_call(
            kernel,
            out_shape=jax.ShapeDtypeStruct((M, d_out), x2d.dtype),
            grid=grid,
            in_specs=in_specs,
            out_specs=pl.BlockSpec((tile_m, d_out), lambda i: (i, 0)),
            compiler_params=pltpu.CompilerParams(
                dimension_semantics=("parallel",),
                vmem_limit_bytes=_VMEM_LIMIT_BYTES),
        )(x2d, *consts)

    try:
        return run(True)
    except Exception:  # pl.Buffered(1) unsupported on this jax/libtpu -> fall back
        return run(False)


def mlp_block_token_mix(x3d, block_params, *, add_residual, tile_d=None):
    """net_tok without transposes: contract over the token (sublane) axis."""
    (w1, b1, g1, be1, w2, b2, g2, be2, w3, b3, g3, be3) = block_params
    B, T, D = x3d.shape
    hidden = w1.shape[1]
    t_out = w3.shape[1]
    if w1.shape[0] != T or (add_residual and t_out != T):
        raise ValueError("token-mixing block shape mismatch")

    # Pre-transpose the tiny token-mixing weights once (outside the kernel).
    w1t = jnp.transpose(w1).astype(_MATMUL_DTYPE)    # (hidden, T)
    w2t = jnp.transpose(w2).astype(_MATMUL_DTYPE)    # (hidden, hidden)
    w3t = jnp.transpose(w3).astype(_MATMUL_DTYPE)    # (t_out, hidden)
    # Pack (bias, gamma, beta) as columns so they broadcast along lanes.
    p1 = jnp.concatenate([b1.T, g1.T, be1.T], axis=1).astype(jnp.float32)  # (hidden, 3)
    p2 = jnp.concatenate([b2.T, g2.T, be2.T], axis=1).astype(jnp.float32)  # (hidden, 3)
    p3 = jnp.concatenate([b3.T, g3.T, be3.T], axis=1).astype(jnp.float32)  # (t_out, 3)

    if tile_d is None:
        tile_d = min(512, D) if D % 128 == 0 else D
    grid = (B, pl.cdiv(D, tile_d))

    kernel = functools.partial(_mlp_cols_kernel, add_residual=add_residual,
                               matmul_dtype=_MATMUL_DTYPE)
    consts = (w1t, p1, w2t, p2, w3t, p3)

    def run(single_buffer_weights):
        in_specs = [pl.BlockSpec((None, T, tile_d), lambda b, d: (b, 0, d))]
        in_specs += [_const_spec(a.shape, 2, single_buffer_weights) for a in consts]
        return pl.pallas_call(
            kernel,
            out_shape=jax.ShapeDtypeStruct((B, t_out, D), x3d.dtype),
            grid=grid,
            in_specs=in_specs,
            out_specs=pl.BlockSpec((None, t_out, tile_d), lambda b, d: (b, 0, d)),
            compiler_params=pltpu.CompilerParams(
                dimension_semantics=("parallel", "parallel"),
                vmem_limit_bytes=_VMEM_LIMIT_BYTES),
        )(x3d, *consts)

    try:
        return run(True)
    except Exception:  # pl.Buffered(1) unsupported on this jax/libtpu -> fall back
        return run(False)


# ----------------------- parameter construction (deterministic) --------------

def _init_mlp_block(key, d_in, hidden, d_out, dtype=jnp.float32):
    ks = jax.random.split(key, 9)

    def lin(k, i, o):
        w = jax.random.normal(k, (i, o), dtype) * 0.02      # stored as (in, out)
        b = jnp.zeros((1, o), dtype)
        return w, b

    def ln(kg, kb, d):
        g = 1.0 + 0.1 * jax.random.normal(kg, (1, d), dtype)
        b = 0.1 * jax.random.normal(kb, (1, d), dtype)
        return g, b

    w1, b1 = lin(ks[0], d_in, hidden)
    w2, b2 = lin(ks[1], hidden, hidden)
    w3, b3 = lin(ks[2], hidden, d_out)
    g1, be1 = ln(ks[3], ks[4], hidden)
    g2, be2 = ln(ks[5], ks[6], hidden)
    g3, be3 = ln(ks[7], ks[8], d_out)
    return (w1, b1, g1, be1, w2, b2, g2, be2, w3, b3, g3, be3)


def init_translator_params(key, num_tok, dim, dim_out, mult=2):
    k_tok, k_sen = jax.random.split(key)
    return {
        "dim_in": dim,
        "dim_out": dim_out,
        "net_tok": _init_mlp_block(k_tok, num_tok, int(num_tok * mult), num_tok),
        "net_sen": _init_mlp_block(k_sen, dim, int(dim * mult), dim_out),
    }


# ------------------------------ forward pass ---------------------------------

def translator_base_rev_forward(x, params):
    dim_in, dim_out = params["dim_in"], params["dim_out"]
    if dim_in == dim_out:
        B, T, D = x.shape
        # transpose -> net_tok -> += identity -> transpose back: fused, computed
        # directly in (B, T, D) layout (no HBM transposes, lane axis stays D).
        y = mlp_block_token_mix(x, params["net_tok"], add_residual=True)
        # net_sen over the model dim; residual == kernel input (no zeros tensor).
        z = mlp_block_rows(y.reshape(B * T, D), params["net_sen"], add_residual=True)
        return z.reshape(B, T, dim_out)
    else:
        # Faithful to the PyTorch else-branch (only shape-consistent when the
        # transposed feature dims happen to match the nets, as in the original).
        xt = jnp.transpose(x, (0, 2, 1))
        B, A, C = xt.shape
        y = mlp_block_rows(xt.reshape(B * A, C), params["net_sen"], add_residual=False)
        y = jnp.transpose(y.reshape(B, A, -1), (0, 2, 1))
        B2, A2, C2 = y.shape
        z = mlp_block_rows(y.reshape(B2 * A2, C2), params["net_tok"], add_residual=False)
        return z.reshape(B2, A2, -1)


# ------------------------------ reference ------------------------------------
# PyTorch-faithful dataflow (transpose -> net_tok -> += -> transpose -> net_sen
# -> +=) with the same bf16 MXU inputs / f32 accumulation as the kernel.

def _mlp_block_ref(x2d, p, add_residual):
    (w1, b1, g1, be1, w2, b2, g2, be2, w3, b3, g3, be3) = p

    def mm(a, w):
        return jnp.dot(a.astype(_MATMUL_DTYPE), w.astype(_MATMUL_DTYPE),
                       preferred_element_type=jnp.float32)

    h = mm(x2d, w1) + b1
    h = _gelu_exact(_ln_last(h, g1, be1))
    h = mm(h, w2) + b2
    h = _gelu_exact(_ln_last(h, g2, be2))
    h = mm(h, w3) + b3
    h = _ln_last(h, g3, be3)
    if add_residual:
        h = h + x2d
    return h


def translator_base_rev_ref(x, params):
    dim_in, dim_out = params["dim_in"], params["dim_out"]
    if dim_in == dim_out:
        xt = jnp.transpose(x, (0, 2, 1))
        B, D, T = xt.shape
        y = _mlp_block_ref(xt.reshape(B * D, T), params["net_tok"], True)
        y = jnp.transpose(y.reshape(B, D, T), (0, 2, 1))
        z = _mlp_block_ref(y.reshape(B * T, D), params["net_sen"], True)
        return z.reshape(B, T, dim_out)
    xt = jnp.transpose(x, (0, 2, 1))
    B, A, C = xt.shape
    y = _mlp_block_ref(xt.reshape(B * A, C), params["net_sen"], False)
    y = jnp.transpose(y.reshape(B, A, -1), (0, 2, 1))
    B2, A2, C2 = y.shape
    z = _mlp_block_ref(y.reshape(B2 * A2, C2), params["net_tok"], False)
    return z.reshape(B2, A2, -1)


# ------------------------------ test ------------------------------------------

if __name__ == "__main__":
    key = jax.random.PRNGKey(0)
    B, num_tok, dim, dim_out, mult = 2, 8, 32, 32, 2   # dim_in == dim_out branch

    k_x, k_p = jax.random.split(key)
    x = jax.random.normal(k_x, (B, num_tok, dim), jnp.float32)
    params = init_translator_params(k_p, num_tok, dim, dim_out, mult)

    out = translator_base_rev_forward(x, params)
    out = jax.block_until_ready(out)

    ref = translator_base_rev_ref(x, params)
    assert out.shape == (B, num_tok, dim_out)
    assert jnp.allclose(out, ref, atol=1e-2, rtol=1e-2), "mismatch vs JAX reference"

    print("KERNEL_OK")
</pallas_src>

<mosaic_0001>
module attributes {stable_mosaic.version = 11 : i64} {
  func.func @_mlp_cols_kernel(%arg0: i32, %arg1: i32, %arg2: memref<1x8x32xf32, #tpu.memory_space<vmem>>, %arg3: memref<16x8xbf16, #tpu.memory_space<vmem>>, %arg4: memref<16x3xf32, #tpu.memory_space<vmem>>, %arg5: memref<16x16xbf16, #tpu.memory_space<vmem>>, %arg6: memref<16x3xf32, #tpu.memory_space<vmem>>, %arg7: memref<8x16xbf16, #tpu.memory_space<vmem>>, %arg8: memref<8x3xf32, #tpu.memory_space<vmem>>, %arg9: memref<1x8x32xf32, #tpu.memory_space<vmem>>) attributes {dimension_semantics = [#tpu.dimension_semantics<parallel>, #tpu.dimension_semantics<parallel>], iteration_bounds = array<i64: 2, 1>, scalar_prefetch = 0 : i64, scratch_operands = 0 : i64, tpu.core_type = #tpu.core_type<tc>, window_params = [{transform_indices = @transform_0, window_bounds = array<i64: 1, 8, 32>}, {pipeline_mode = #tpu.pipeline_mode<synchronous>, transform_indices = @transform_1, window_bounds = array<i64: 16, 8>}, {pipeline_mode = #tpu.pipeline_mode<synchronous>, transform_indices = @transform_2, window_bounds = array<i64: 16, 3>}, {pipeline_mode = #tpu.pipeline_mode<synchronous>, transform_indices = @transform_3, window_bounds = array<i64: 16, 16>}, {pipeline_mode = #tpu.pipeline_mode<synchronous>, transform_indices = @transform_4, window_bounds = array<i64: 16, 3>}, {pipeline_mode = #tpu.pipeline_mode<synchronous>, transform_indices = @transform_5, window_bounds = array<i64: 8, 16>}, {pipeline_mode = #tpu.pipeline_mode<synchronous>, transform_indices = @transform_6, window_bounds = array<i64: 8, 3>}, {transform_indices = @transform_7, window_bounds = array<i64: 1, 8, 32>}]} {
    %c0 = arith.constant 0 : index
    %c0_0 = arith.constant 0 : index
    %c0_1 = arith.constant 0 : index
    %0 = vector.load %arg2[%c0, %c0_0, %c0_1] : memref<1x8x32xf32, #tpu.memory_space<vmem>>, vector<1x8x32xf32>
    %1 = vector.shape_cast %0 : vector<1x8x32xf32> to vector<8x32xf32>
    %c0_2 = arith.constant 0 : index
    %c0_3 = arith.constant 0 : index
    %2 = vector.load %arg3[%c0_2, %c0_3] : memref<16x8xbf16, #tpu.memory_space<vmem>>, vector<16x8xbf16>
    %3 = arith.truncf %1 : vector<8x32xf32> to vector<8x32xbf16>
    %cst = arith.constant dense<0.000000e+00> : vector<16x32xf32>
    %4 = tpu.matmul %2, %3, %cst {dimension_numbers = #tpu.dot_dimension_numbers<[1], [0], [0], [1], [0, 0, 1, 1], [], []>} : vector<16x8xbf16>, vector<8x32xbf16>, vector<16x32xf32> -> vector<16x32xf32>
    %c0_4 = arith.constant 0 : index
    %c0_5 = arith.constant 0 : index
    %5 = vector.load %arg4[%c0_4, %c0_5] : memref<16x3xf32, #tpu.memory_space<vmem>>, vector<16x1xf32>
    %6 = vector.broadcast %5 : vector<16x1xf32> to vector<16x32xf32>
    %7 = arith.addf %4, %6 : vector<16x32xf32>
    %c0_6 = arith.constant 0 : index
    %c1 = arith.constant 1 : index
    %8 = vector.load %arg4[%c0_6, %c1] : memref<16x3xf32, #tpu.memory_space<vmem>>, vector<16x1xf32>
    %c0_7 = arith.constant 0 : index
    %c2 = arith.constant 2 : index
    %9 = vector.load %arg4[%c0_7, %c2] : memref<16x3xf32, #tpu.memory_space<vmem>>, vector<16x1xf32>
    %cst_8 = arith.constant dense<0.000000e+00> : vector<32xf32>
    %10 = vector.multi_reduction <add>, %7, %cst_8 [0] : vector<16x32xf32> to vector<32xf32>
    %11 = vector.shape_cast %10 : vector<32xf32> to vector<1x32xf32>
    %cst_9 = arith.constant 1.600000e+01 : f32
    %12 = vector.broadcast %cst_9 : f32 to vector<1x32xf32>
    %13 = arith.divf %11, %12 : vector<1x32xf32>
    %14 = vector.broadcast %13 : vector<1x32xf32> to vector<16x32xf32>
    %15 = arith.subf %7, %14 : vector<16x32xf32>
    %16 = arith.mulf %15, %15 : vector<16x32xf32>
    %cst_10 = arith.constant dense<0.000000e+00> : vector<32xf32>
    %17 = vector.multi_reduction <add>, %16, %cst_10 [0] : vector<16x32xf32> to vector<32xf32>
    %18 = vector.shape_cast %17 : vector<32xf32> to vector<1x32xf32>
    %cst_11 = arith.constant 1.600000e+01 : f32
    %19 = vector.broadcast %cst_11 : f32 to vector<1x32xf32>
    %20 = arith.divf %18, %19 : vector<1x32xf32>
    %21 = vector.broadcast %13 : vector<1x32xf32> to vector<16x32xf32>
    %22 = arith.subf %7, %21 : vector<16x32xf32>
    %cst_12 = arith.constant 9.99999974E-6 : f32
    %23 = vector.broadcast %cst_12 : f32 to vector<1x32xf32>
    %24 = arith.addf %20, %23 : vector<1x32xf32>
    %25 = math.rsqrt %24 : vector<1x32xf32>
    %26 = vector.broadcast %25 : vector<1x32xf32> to vector<16x32xf32>
    %27 = arith.mulf %22, %26 : vector<16x32xf32>
    %28 = vector.broadcast %8 : vector<16x1xf32> to vector<16x32xf32>
    %29 = arith.mulf %27, %28 : vector<16x32xf32>
    %30 = vector.broadcast %9 : vector<16x1xf32> to vector<16x32xf32>
    %31 = arith.addf %29, %30 : vector<16x32xf32>
    %cst_13 = arith.constant 5.000000e-01 : f32
    %32 = vector.broadcast %cst_13 : f32 to vector<16x32xf32>
    %33 = arith.mulf %32, %31 : vector<16x32xf32>
    %cst_14 = arith.constant 0.707106769 : f32
    %34 = vector.broadcast %cst_14 : f32 to vector<16x32xf32>
    %35 = arith.mulf %31, %34 : vector<16x32xf32>
    %36 = math.erf %35 : vector<16x32xf32>
    %cst_15 = arith.constant 1.000000e+00 : f32
    %37 = vector.broadcast %cst_15 : f32 to vector<16x32xf32>
    %38 = arith.addf %37, %36 : vector<16x32xf32>
    %39 = arith.mulf %33, %38 : vector<16x32xf32>
    %c0_16 = arith.constant 0 : index
    %c0_17 = arith.constant 0 : index
    %40 = vector.load %arg5[%c0_16, %c0_17] : memref<16x16xbf16, #tpu.memory_space<vmem>>, vector<16x16xbf16>
    %41 = arith.truncf %39 : vector<16x32xf32> to vector<16x32xbf16>
    %cst_18 = arith.constant dense<0.000000e+00> : vector<16x32xf32>
    %42 = tpu.matmul %40, %41, %cst_18 {dimension_numbers = #tpu.dot_dimension_numbers<[1], [0], [0], [1], [0, 0, 1, 1], [], []>} : vector<16x16xbf16>, vector<16x32xbf16>, vector<16x32xf32> -> vector<16x32xf32>
    %c0_19 = arith.constant 0 : index
    %c0_20 = arith.constant 0 : index
    %43 = vector.load %arg6[%c0_19, %c0_20] : memref<16x3xf32, #tpu.memory_space<vmem>>, vector<16x1xf32>
    %44 = vector.broadcast %43 : vector<16x1xf32> to vector<16x32xf32>
    %45 = arith.addf %42, %44 : vector<16x32xf32>
    %c0_21 = arith.constant 0 : index
    %c1_22 = arith.constant 1 : index
    %46 = vector.load %arg6[%c0_21, %c1_22] : memref<16x3xf32, #tpu.memory_space<vmem>>, vector<16x1xf32>
    %c0_23 = arith.constant 0 : index
    %c2_24 = arith.constant 2 : index
    %47 = vector.load %arg6[%c0_23, %c2_24] : memref<16x3xf32, #tpu.memory_space<vmem>>, vector<16x1xf32>
    %cst_25 = arith.constant dense<0.000000e+00> : vector<32xf32>
    %48 = vector.multi_reduction <add>, %45, %cst_25 [0] : vector<16x32xf32> to vector<32xf32>
    %49 = vector.shape_cast %48 : vector<32xf32> to vector<1x32xf32>
    %cst_26 = arith.constant 1.600000e+01 : f32
    %50 = vector.broadcast %cst_26 : f32 to vector<1x32xf32>
    %51 = arith.divf %49, %50 : vector<1x32xf32>
    %52 = vector.broadcast %51 : vector<1x32xf32> to vector<16x32xf32>
    %53 = arith.subf %45, %52 : vector<16x32xf32>
    %54 = arith.mulf %53, %53 : vector<16x32xf32>
    %cst_27 = arith.constant dense<0.000000e+00> : vector<32xf32>
    %55 = vector.multi_reduction <add>, %54, %cst_27 [0] : vector<16x32xf32> to vector<32xf32>
    %56 = vector.shape_cast %55 : vector<32xf32> to vector<1x32xf32>
    %cst_28 = arith.constant 1.600000e+01 : f32
    %57 = vector.broadcast %cst_28 : f32 to vector<1x32xf32>
    %58 = arith.divf %56, %57 : vector<1x32xf32>
    %59 = vector.broadcast %51 : vector<1x32xf32> to vector<16x32xf32>
    %60 = arith.subf %45, %59 : vector<16x32xf32>
    %cst_29 = arith.constant 9.99999974E-6 : f32
    %61 = vector.broadcast %cst_29 : f32 to vector<1x32xf32>
    %62 = arith.addf %58, %61 : vector<1x32xf32>
    %63 = math.rsqrt %62 : vector<1x32xf32>
    %64 = vector.broadcast %63 : vector<1x32xf32> to vector<16x32xf32>
    %65 = arith.mulf %60, %64 : vector<16x32xf32>
    %66 = vector.broadcast %46 : vector<16x1xf32> to vector<16x32xf32>
    %67 = arith.mulf %65, %66 : vector<16x32xf32>
    %68 = vector.broadcast %47 : vector<16x1xf32> to vector<16x32xf32>
    %69 = arith.addf %67, %68 : vector<16x32xf32>
    %cst_30 = arith.constant 5.000000e-01 : f32
    %70 = vector.broadcast %cst_30 : f32 to vector<16x32xf32>
    %71 = arith.mulf %70, %69 : vector<16x32xf32>
    %cst_31 = arith.constant 0.707106769 : f32
    %72 = vector.broadcast %cst_31 : f32 to vector<16x32xf32>
    %73 = arith.mulf %69, %72 : vector<16x32xf32>
    %74 = math.erf %73 : vector<16x32xf32>
    %cst_32 = arith.constant 1.000000e+00 : f32
    %75 = vector.broadcast %cst_32 : f32 to vector<16x32xf32>
    %76 = arith.addf %75, %74 : vector<16x32xf32>
    %77 = arith.mulf %71, %76 : vector<16x32xf32>
    %c0_33 = arith.constant 0 : index
    %c0_34 = arith.constant 0 : index
    %78 = vector.load %arg7[%c0_33, %c0_34] : memref<8x16xbf16, #tpu.memory_space<vmem>>, vector<8x16xbf16>
    %79 = arith.truncf %77 : vector<16x32xf32> to vector<16x32xbf16>
    %cst_35 = arith.constant dense<0.000000e+00> : vector<8x32xf32>
    %80 = tpu.matmul %78, %79, %cst_35 {dimension_numbers = #tpu.dot_dimension_numbers<[1], [0], [0], [1], [0, 0, 1, 1], [], []>} : vector<8x16xbf16>, vector<16x32xbf16>, vector<8x32xf32> -> vector<8x32xf32>
    %c0_36 = arith.constant 0 : index
    %c0_37 = arith.constant 0 : index
    %81 = vector.load %arg8[%c0_36, %c0_37] : memref<8x3xf32, #tpu.memory_space<vmem>>, vector<8x1xf32>
    %82 = vector.broadcast %81 : vector<8x1xf32> to vector<8x32xf32>
    %83 = arith.addf %80, %82 : vector<8x32xf32>
    %c0_38 = arith.constant 0 : index
    %c1_39 = arith.constant 1 : index
    %84 = vector.load %arg8[%c0_38, %c1_39] : memref<8x3xf32, #tpu.memory_space<vmem>>, vector<8x1xf32>
    %c0_40 = arith.constant 0 : index
    %c2_41 = arith.constant 2 : index
    %85 = vector.load %arg8[%c0_40, %c2_41] : memref<8x3xf32, #tpu.memory_space<vmem>>, vector<8x1xf32>
    %cst_42 = arith.constant dense<0.000000e+00> : vector<32xf32>
    %86 = vector.multi_reduction <add>, %83, %cst_42 [0] : vector<8x32xf32> to vector<32xf32>
    %87 = vector.shape_cast %86 : vector<32xf32> to vector<1x32xf32>
    %cst_43 = arith.constant 8.000000e+00 : f32
    %88 = vector.broadcast %cst_43 : f32 to vector<1x32xf32>
    %89 = arith.divf %87, %88 : vector<1x32xf32>
    %90 = vector.broadcast %89 : vector<1x32xf32> to vector<8x32xf32>
    %91 = arith.subf %83, %90 : vector<8x32xf32>
    %92 = arith.mulf %91, %91 : vector<8x32xf32>
    %cst_44 = arith.constant dense<0.000000e+00> : vector<32xf32>
    %93 = vector.multi_reduction <add>, %92, %cst_44 [0] : vector<8x32xf32> to vector<32xf32>
    %94 = vector.shape_cast %93 : vector<32xf32> to vector<1x32xf32>
    %cst_45 = arith.constant 8.000000e+00 : f32
    %95 = vector.broadcast %cst_45 : f32 to vector<1x32xf32>
    %96 = arith.divf %94, %95 : vector<1x32xf32>
    %97 = vector.broadcast %89 : vector<1x32xf32> to vector<8x32xf32>
    %98 = arith.subf %83, %97 : vector<8x32xf32>
    %cst_46 = arith.constant 9.99999974E-6 : f32
    %99 = vector.broadcast %cst_46 : f32 to vector<1x32xf32>
    %100 = arith.addf %96, %99 : vector<1x32xf32>
    %101 = math.rsqrt %100 : vector<1x32xf32>
    %102 = vector.broadcast %101 : vector<1x32xf32> to vector<8x32xf32>
    %103 = arith.mulf %98, %102 : vector<8x32xf32>
    %104 = vector.broadcast %84 : vector<8x1xf32> to vector<8x32xf32>
    %105 = arith.mulf %103, %104 : vector<8x32xf32>
    %106 = vector.broadcast %85 : vector<8x1xf32> to vector<8x32xf32>
    %107 = arith.addf %105, %106 : vector<8x32xf32>
    %108 = arith.addf %107, %1 : vector<8x32xf32>
    %c0_47 = arith.constant 0 : index
    %c0_48 = arith.constant 0 : index
    %c0_49 = arith.constant 0 : index
    %109 = vector.load %arg9[%c0_47, %c0_48, %c0_49] : memref<1x8x32xf32, #tpu.memory_space<vmem>>, vector<1x8x32xf32>
    %110 = vector.shape_cast %109 : vector<1x8x32xf32> to vector<8x32xf32>
    %111 = vector.shape_cast %108 : vector<8x32xf32> to vector<1x8x32xf32>
    tpu.vector_store %arg9[%c0_47, %c0_48, %c0_49], %111 {strides = array<i32>} : memref<1x8x32xf32, #tpu.memory_space<vmem>>, vector<1x8x32xf32>,
    return
  }
  func.func @transform_0(%arg0: i32, %arg1: i32) -> (i32, i32, i32) {
    %c0_i32 = arith.constant 0 : i32
    %c0_i32_0 = arith.constant 0 : i32
    return %arg0, %c0_i32, %arg1 : i32, i32, i32
  }
  func.func @transform_1(%arg0: i32, %arg1: i32) -> (i32, i32) {
    %c0_i32 = arith.constant 0 : i32
    %c0_i32_0 = arith.constant 0 : i32
    %c0_i32_1 = arith.constant 0 : i32
    return %c0_i32, %c0_i32_0 : i32, i32
  }
  func.func @transform_2(%arg0: i32, %arg1: i32) -> (i32, i32) {
    %c0_i32 = arith.constant 0 : i32
    %c0_i32_0 = arith.constant 0 : i32
    %c0_i32_1 = arith.constant 0 : i32
    return %c0_i32, %c0_i32_0 : i32, i32
  }
  func.func @transform_3(%arg0: i32, %arg1: i32) -> (i32, i32) {
    %c0_i32 = arith.constant 0 : i32
    %c0_i32_0 = arith.constant 0 : i32
    %c0_i32_1 = arith.constant 0 : i32
    return %c0_i32, %c0_i32_0 : i32, i32
  }
  func.func @transform_4(%arg0: i32, %arg1: i32) -> (i32, i32) {
    %c0_i32 = arith.constant 0 : i32
    %c0_i32_0 = arith.constant 0 : i32
    %c0_i32_1 = arith.constant 0 : i32
    return %c0_i32, %c0_i32_0 : i32, i32
  }
  func.func @transform_5(%arg0: i32, %arg1: i32) -> (i32, i32) {
    %c0_i32 = arith.constant 0 : i32
    %c0_i32_0 = arith.constant 0 : i32
    %c0_i32_1 = arith.constant 0 : i32
    return %c0_i32, %c0_i32_0 : i32, i32
  }
  func.func @transform_6(%arg0: i32, %arg1: i32) -> (i32, i32) {
    %c0_i32 = arith.constant 0 : i32
    %c0_i32_0 = arith.constant 0 : i32
    %c0_i32_1 = arith.constant 0 : i32
    return %c0_i32, %c0_i32_0 : i32, i32
  }
  func.func @transform_7(%arg0: i32, %arg1: i32) -> (i32, i32, i32) {
    %c0_i32 = arith.constant 0 : i32
    %c0_i32_0 = arith.constant 0 : i32
    return %arg0, %c0_i32, %arg1 : i32, i32, i32
  }
}

module attributes {stable_mosaic.version = 11 : i64} {
  func.func @_mlp_cols_kernel(%arg0: i32, %arg1: i32, %arg2: memref<1x8x32xf32, #tpu.memory_space<vmem>>, %arg3: memref<16x8xbf16, #tpu.memory_space<vmem>>, %arg4: memref<16x3xf32, #tpu.memory_space<vmem>>, %arg5: memref<16x16xbf16, #tpu.memory_space<vmem>>, %arg6: memref<16x3xf32, #tpu.memory_space<vmem>>, %arg7: memref<8x16xbf16, #tpu.memory_space<vmem>>, %arg8: memref<8x3xf32, #tpu.memory_space<vmem>>, %arg9: memref<1x8x32xf32, #tpu.memory_space<vmem>>) attributes {dimension_semantics = [#tpu.dimension_semantics<parallel>, #tpu.dimension_semantics<parallel>], iteration_bounds = array<i64: 2, 1>, scalar_prefetch = 0 : i64, scratch_operands = 0 : i64, tpu.core_type = #tpu.core_type<tc>, window_params = [{transform_indices = @transform_0, window_bounds = array<i64: 1, 8, 32>}, {pipeline_mode = #tpu.pipeline_mode<synchronous>, transform_indices = @transform_1, window_bounds = array<i64: 16, 8>}, {pipeline_mode = #tpu.pipeline_mode<synchronous>, transform_indices = @transform_2, window_bounds = array<i64: 16, 3>}, {pipeline_mode = #tpu.pipeline_mode<synchronous>, transform_indices = @transform_3, window_bounds = array<i64: 16, 16>}, {pipeline_mode = #tpu.pipeline_mode<synchronous>, transform_indices = @transform_4, window_bounds = array<i64: 16, 3>}, {pipeline_mode = #tpu.pipeline_mode<synchronous>, transform_indices = @transform_5, window_bounds = array<i64: 8, 16>}, {pipeline_mode = #tpu.pipeline_mode<synchronous>, transform_indices = @transform_6, window_bounds = array<i64: 8, 3>}, {transform_indices = @transform_7, window_bounds = array<i64: 1, 8, 32>}]} {
    %c0 = arith.constant 0 : index
    %c0_0 = arith.constant 0 : index
    %c0_1 = arith.constant 0 : index
    %0 = vector.load %arg2[%c0, %c0_0, %c0_1] : memref<1x8x32xf32, #tpu.memory_space<vmem>>, vector<1x8x32xf32>
    %1 = vector.shape_cast %0 : vector<1x8x32xf32> to vector<8x32xf32>
    %c0_2 = arith.constant 0 : index
    %c0_3 = arith.constant 0 : index
    %2 = vector.load %arg3[%c0_2, %c0_3] : memref<16x8xbf16, #tpu.memory_space<vmem>>, vector<16x8xbf16>
    %3 = arith.truncf %1 : vector<8x32xf32> to vector<8x32xbf16>
    %cst = arith.constant dense<0.000000e+00> : vector<16x32xf32>
    %4 = tpu.matmul %2, %3, %cst {dimension_numbers = #tpu.dot_dimension_numbers<[1], [0], [0], [1], [0, 0, 1, 1], [], []>} : vector<16x8xbf16>, vector<8x32xbf16>, vector<16x32xf32> -> vector<16x32xf32>
    %c0_4 = arith.constant 0 : index
    %c0_5 = arith.constant 0 : index
    %5 = vector.load %arg4[%c0_4, %c0_5] : memref<16x3xf32, #tpu.memory_space<vmem>>, vector<16x1xf32>
    %6 = vector.broadcast %5 : vector<16x1xf32> to vector<16x32xf32>
    %7 = arith.addf %4, %6 : vector<16x32xf32>
    %c0_6 = arith.constant 0 : index
    %c1 = arith.constant 1 : index
    %8 = vector.load %arg4[%c0_6, %c1] : memref<16x3xf32, #tpu.memory_space<vmem>>, vector<16x1xf32>
    %c0_7 = arith.constant 0 : index
    %c2 = arith.constant 2 : index
    %9 = vector.load %arg4[%c0_7, %c2] : memref<16x3xf32, #tpu.memory_space<vmem>>, vector<16x1xf32>
    %cst_8 = arith.constant dense<0.000000e+00> : vector<32xf32>
    %10 = vector.multi_reduction <add>, %7, %cst_8 [0] : vector<16x32xf32> to vector<32xf32>
    %11 = vector.shape_cast %10 : vector<32xf32> to vector<1x32xf32>
    %cst_9 = arith.constant 1.600000e+01 : f32
    %12 = vector.broadcast %cst_9 : f32 to vector<1x32xf32>
    %13 = arith.divf %11, %12 : vector<1x32xf32>
    %14 = vector.broadcast %13 : vector<1x32xf32> to vector<16x32xf32>
    %15 = arith.subf %7, %14 : vector<16x32xf32>
    %16 = arith.mulf %15, %15 : vector<16x32xf32>
    %cst_10 = arith.constant dense<0.000000e+00> : vector<32xf32>
    %17 = vector.multi_reduction <add>, %16, %cst_10 [0] : vector<16x32xf32> to vector<32xf32>
    %18 = vector.shape_cast %17 : vector<32xf32> to vector<1x32xf32>
    %cst_11 = arith.constant 1.600000e+01 : f32
    %19 = vector.broadcast %cst_11 : f32 to vector<1x32xf32>
    %20 = arith.divf %18, %19 : vector<1x32xf32>
    %21 = vector.broadcast %13 : vector<1x32xf32> to vector<16x32xf32>
    %22 = arith.subf %7, %21 : vector<16x32xf32>
    %cst_12 = arith.constant 9.99999974E-6 : f32
    %23 = vector.broadcast %cst_12 : f32 to vector<1x32xf32>
    %24 = arith.addf %20, %23 : vector<1x32xf32>
    %25 = math.rsqrt %24 : vector<1x32xf32>
    %26 = vector.broadcast %25 : vector<1x32xf32> to vector<16x32xf32>
    %27 = arith.mulf %22, %26 : vector<16x32xf32>
    %28 = vector.broadcast %8 : vector<16x1xf32> to vector<16x32xf32>
    %29 = arith.mulf %27, %28 : vector<16x32xf32>
    %30 = vector.broadcast %9 : vector<16x1xf32> to vector<16x32xf32>
    %31 = arith.addf %29, %30 : vector<16x32xf32>
    %cst_13 = arith.constant 5.000000e-01 : f32
    %32 = vector.broadcast %cst_13 : f32 to vector<16x32xf32>
    %33 = arith.mulf %32, %31 : vector<16x32xf32>
    %cst_14 = arith.constant 0.707106769 : f32
    %34 = vector.broadcast %cst_14 : f32 to vector<16x32xf32>
    %35 = arith.mulf %31, %34 : vector<16x32xf32>
    %36 = math.erf %35 : vector<16x32xf32>
    %cst_15 = arith.constant 1.000000e+00 : f32
    %37 = vector.broadcast %cst_15 : f32 to vector<16x32xf32>
    %38 = arith.addf %37, %36 : vector<16x32xf32>
    %39 = arith.mulf %33, %38 : vector<16x32xf32>
    %c0_16 = arith.constant 0 : index
    %c0_17 = arith.constant 0 : index
    %40 = vector.load %arg5[%c0_16, %c0_17] : memref<16x16xbf16, #tpu.memory_space<vmem>>, vector<16x16xbf16>
    %41 = arith.truncf %39 : vector<16x32xf32> to vector<16x32xbf16>
    %cst_18 = arith.constant dense<0.000000e+00> : vector<16x32xf32>
    %42 = tpu.matmul %40, %41, %cst_18 {dimension_numbers = #tpu.dot_dimension_numbers<[1], [0], [0], [1], [0, 0, 1, 1], [], []>} : vector<16x16xbf16>, vector<16x32xbf16>, vector<16x32xf32> -> vector<16x32xf32>
    %c0_19 = arith.constant 0 : index
    %c0_20 = arith.constant 0 : index
    %43 = vector.load %arg6[%c0_19, %c0_20] : memref<16x3xf32, #tpu.memory_space<vmem>>, vector<16x1xf32>
    %44 = vector.broadcast %43 : vector<16x1xf32> to vector<16x32xf32>
    %45 = arith.addf %42, %44 : vector<16x32xf32>
    %c0_21 = arith.constant 0 : index
    %c1_22 = arith.constant 1 : index
    %46 = vector.load %arg6[%c0_21, %c1_22] : memref<16x3xf32, #tpu.memory_space<vmem>>, vector<16x1xf32>
    %c0_23 = arith.constant 0 : index
    %c2_24 = arith.constant 2 : index
    %47 = vector.load %arg6[%c0_23, %c2_24] : memref<16x3xf32, #tpu.memory_space<vmem>>, vector<16x1xf32>
    %cst_25 = arith.constant dense<0.000000e+00> : vector<32xf32>
    %48 = vector.multi_reduction <add>, %45, %cst_25 [0] : vector<16x32xf32> to vector<32xf32>
    %49 = vector.shape_cast %48 : vector<32xf32> to vector<1x32xf32>
    %cst_26 = arith.constant 1.600000e+01 : f32
    %50 = vector.broadcast %cst_26 : f32 to vector<1x32xf32>
    %51 = arith.divf %49, %50 : vector<1x32xf32>
    %52 = vector.broadcast %51 : vector<1x32xf32> to vector<16x32xf32>
    %53 = arith.subf %45, %52 : vector<16x32xf32>
    %54 = arith.mulf %53, %53 : vector<16x32xf32>
    %cst_27 = arith.constant dense<0.000000e+00> : vector<32xf32>
    %55 = vector.multi_reduction <add>, %54, %cst_27 [0] : vector<16x32xf32> to vector<32xf32>
    %56 = vector.shape_cast %55 : vector<32xf32> to vector<1x32xf32>
    %cst_28 = arith.constant 1.600000e+01 : f32
    %57 = vector.broadcast %cst_28 : f32 to vector<1x32xf32>
    %58 = arith.divf %56, %57 : vector<1x32xf32>
    %59 = vector.broadcast %51 : vector<1x32xf32> to vector<16x32xf32>
    %60 = arith.subf %45, %59 : vector<16x32xf32>
    %cst_29 = arith.constant 9.99999974E-6 : f32
    %61 = vector.broadcast %cst_29 : f32 to vector<1x32xf32>
    %62 = arith.addf %58, %61 : vector<1x32xf32>
    %63 = math.rsqrt %62 : vector<1x32xf32>
    %64 = vector.broadcast %63 : vector<1x32xf32> to vector<16x32xf32>
    %65 = arith.mulf %60, %64 : vector<16x32xf32>
    %66 = vector.broadcast %46 : vector<16x1xf32> to vector<16x32xf32>
    %67 = arith.mulf %65, %66 : vector<16x32xf32>
    %68 = vector.broadcast %47 : vector<16x1xf32> to vector<16x32xf32>
    %69 = arith.addf %67, %68 : vector<16x32xf32>
    %cst_30 = arith.constant 5.000000e-01 : f32
    %70 = vector.broadcast %cst_30 : f32 to vector<16x32xf32>
    %71 = arith.mulf %70, %69 : vector<16x32xf32>
    %cst_31 = arith.constant 0.707106769 : f32
    %72 = vector.broadcast %cst_31 : f32 to vector<16x32xf32>
    %73 = arith.mulf %69, %72 : vector<16x32xf32>
    %74 = math.erf %73 : vector<16x32xf32>
    %cst_32 = arith.constant 1.000000e+00 : f32
    %75 = vector.broadcast %cst_32 : f32 to vector<16x32xf32>
    %76 = arith.addf %75, %74 : vector<16x32xf32>
    %77 = arith.mulf %71, %76 : vector<16x32xf32>
    %c0_33 = arith.constant 0 : index
    %c0_34 = arith.constant 0 : index
    %78 = vector.load %arg7[%c0_33, %c0_34] : memref<8x16xbf16, #tpu.memory_space<vmem>>, vector<8x16xbf16>
    %79 = arith.truncf %77 : vector<16x32xf32> to vector<16x32xbf16>
    %cst_35 = arith.constant dense<0.000000e+00> : vector<8x32xf32>
    %80 = tpu.matmul %78, %79, %cst_35 {dimension_numbers = #tpu.dot_dimension_numbers<[1], [0], [0], [1], [0, 0, 1, 1], [], []>} : vector<8x16xbf16>, vector<16x32xbf16>, vector<8x32xf32> -> vector<8x32xf32>
    %c0_36 = arith.constant 0 : index
    %c0_37 = arith.constant 0 : index
    %81 = vector.load %arg8[%c0_36, %c0_37] : memref<8x3xf32, #tpu.memory_space<vmem>>, vector<8x1xf32>
    %82 = vector.broadcast %81 : vector<8x1xf32> to vector<8x32xf32>
    %83 = arith.addf %80, %82 : vector<8x32xf32>
    %c0_38 = arith.constant 0 : index
    %c1_39 = arith.constant 1 : index
    %84 = vector.load %arg8[%c0_38, %c1_39] : memref<8x3xf32, #tpu.memory_space<vmem>>, vector<8x1xf32>
    %c0_40 = arith.constant 0 : index
    %c2_41 = arith.constant 2 : index
    %85 = vector.load %arg8[%c0_40, %c2_41] : memref<8x3xf32, #tpu.memory_space<vmem>>, vector<8x1xf32>
    %cst_42 = arith.constant dense<0.000000e+00> : vector<32xf32>
    %86 = vector.multi_reduction <add>, %83, %cst_42 [0] : vector<8x32xf32> to vector<32xf32>
    %87 = vector.shape_cast %86 : vector<32xf32> to vector<1x32xf32>
    %cst_43 = arith.constant 8.000000e+00 : f32
    %88 = vector.broadcast %cst_43 : f32 to vector<1x32xf32>
    %89 = arith.divf %87, %88 : vector<1x32xf32>
    %90 = vector.broadcast %89 : vector<1x32xf32> to vector<8x32xf32>
    %91 = arith.subf %83, %90 : vector<8x32xf32>
    %92 = arith.mulf %91, %91 : vector<8x32xf32>
    %cst_44 = arith.constant dense<0.000000e+00> : vector<32xf32>
    %93 = vector.multi_reduction <add>, %92, %cst_44 [0] : vector<8x32xf32> to vector<32xf32>
    %94 = vector.shape_cast %93 : vector<32xf32> to vector<1x32xf32>
    %cst_45 = arith.constant 8.000000e+00 : f32
    %95 = vector.broadcast %cst_45 : f32 to vector<1x32xf32>
    %96 = arith.divf %94, %95 : vector<1x32xf32>
    %97 = vector.broadcast %89 : vector<1x32xf32> to vector<8x32xf32>
    %98 = arith.subf %83, %97 : vector<8x32xf32>
    %cst_46 = arith.constant 9.99999974E-6 : f32
    %99 = vector.broadcast %cst_46 : f32 to vector<1x32xf32>
    %100 = arith.addf %96, %99 : vector<1x32xf32>
    %101 = math.rsqrt %100 : vector<1x32xf32>
    %102 = vector.broadcast %101 : vector<1x32xf32> to vector<8x32xf32>
    %103 = arith.mulf %98, %102 : vector<8x32xf32>
    %104 = vector.broadcast %84 : vector<8x1xf32> to vector<8x32xf32>
    %105 = arith.mulf %103, %104 : vector<8x32xf32>
    %106 = vector.broadcast %85 : vector<8x1xf32> to vector<8x32xf32>
    %107 = arith.addf %105, %106 : vector<8x32xf32>
    %108 = arith.addf %107, %1 : vector<8x32xf32>
    %c0_47 = arith.constant 0 : index
    %c0_48 = arith.constant 0 : index
    %c0_49 = arith.constant 0 : index
    %109 = vector.load %arg9[%c0_47, %c0_48, %c0_49] : memref<1x8x32xf32, #tpu.memory_space<vmem>>, vector<1x8x32xf32>
    %110 = vector.shape_cast %109 : vector<1x8x32xf32> to vector<8x32xf32>
    %111 = vector.shape_cast %108 : vector<8x32xf32> to vector<1x8x32xf32>
    tpu.vector_store %arg9[%c0_47, %c0_48, %c0_49], %111 {strides = array<i32>} : memref<1x8x32xf32, #tpu.memory_space<vmem>>, vector<1x8x32xf32>,
    return
  }
  func.func @transform_0(%arg0: i32, %arg1: i32) -> (i32, i32, i32) {
    %c0_i32 = arith.constant 0 : i32
    %c0_i32_0 = arith.constant 0 : i32
    return %arg0, %c0_i32, %arg1 : i32, i32, i32
  }
  func.func @transform_1(%arg0: i32, %arg1: i32) -> (i32, i32) {
    %c0_i32 = arith.constant 0 : i32
    %c0_i32_0 = arith.constant 0 : i32
    %c0_i32_1 = arith.constant 0 : i32
    return %c0_i32, %c0_i32_0 : i32, i32
  }
  func.func @transform_2(%arg0: i32, %arg1: i32) -> (i32, i32) {
    %c0_i32 = arith.constant 0 : i32
    %c0_i32_0 = arith.constant 0 : i32
    %c0_i32_1 = arith.constant 0 : i32
    return %c0_i32, %c0_i32_0 : i32, i32
  }
  func.func @transform_3(%arg0: i32, %arg1: i32) -> (i32, i32) {
    %c0_i32 = arith.constant 0 : i32
    %c0_i32_0 = arith.constant 0 : i32
    %c0_i32_1 = arith.constant 0 : i32
    return %c0_i32, %c0_i32_0 : i32, i32
  }
  func.func @transform_4(%arg0: i32, %arg1: i32) -> (i32, i32) {
    %c0_i32 = arith.constant 0 : i32
    %c0_i32_0 = arith.constant 0 : i32
    %c0_i32_1 = arith.constant 0 : i32
    return %c0_i32, %c0_i32_0 : i32, i32
  }
  func.func @transform_5(%arg0: i32, %arg1: i32) -> (i32, i32) {
    %c0_i32 = arith.constant 0 : i32
    %c0_i32_0 = arith.constant 0 : i32
    %c0_i32_1 = arith.constant 0 : i32
    return %c0_i32, %c0_i32_0 : i32, i32
  }
  func.func @transform_6(%arg0: i32, %arg1: i32) -> (i32, i32) {
    %c0_i32 = arith.constant 0 : i32
    %c0_i32_0 = arith.constant 0 : i32
    %c0_i32_1 = arith.constant 0 : i32
    return %c0_i32, %c0_i32_0 : i32, i32
  }
  func.func @transform_7(%arg0: i32, %arg1: i32) -> (i32, i32, i32) {
    %c0_i32 = arith.constant 0 : i32
    %c0_i32_0 = arith.constant 0 : i32
    return %arg0, %c0_i32, %arg1 : i32, i32, i32
  }
}

</mosaic_0001>

<llo_original>
// kernel: tpu_custom_call.1
$region0: #{tpu_custom_call.1}
  #allocation0 [shape = 'u32[]', space=smem, size = 0x4, offset = 0x4, fixed_abs, tag = 'smem constant byte address 0x4 - core index']
  #allocation1 [shape = 'u32[144,128]{1,0:T(1,128)}', space=vmem, size = 0x12000, scoped, tag = 'internal scratch']
  %s0 = inlined_call_operand.vmem [shape: f32[2,8,32], index: 0, kind: input, shape index: {}]
  %s1 = inlined_call_operand.vmem [shape: bf16[16,8], index: 1, kind: input, shape index: {}]
  %s2 = inlined_call_operand.vmem [shape: f32[16,3], index: 2, kind: input, shape index: {}]
  %s3 = inlined_call_operand.vmem [shape: bf16[16,16], index: 3, kind: input, shape index: {}]
  %s4 = inlined_call_operand.vmem [shape: f32[16,3], index: 4, kind: input, shape index: {}]
  %s5 = inlined_call_operand.vmem [shape: bf16[8,16], index: 5, kind: input, shape index: {}]
  %s6 = inlined_call_operand.vmem [shape: f32[8,3], index: 6, kind: input, shape index: {}]
  %s7 = inlined_call_operand.hbm [shape: f32[2,8,32], index: 7, kind: output, shape index: {}]
  %s8 = sld [smem:[#allocation0]]
  $region61: #{tpu_custom_call.1} parent=0
    _
  %s10 = ssub.s32 1, %s8
  %s11 = scalar_select 0, %s10, %s8
  $region1: #{tpu_custom_call.1} parent=0
    #allocation2 [shape = 'u8[8192]{0}', space=vmem, size = 0x2000, scoped, tag = 'output window, operand 0']
    #allocation3 [shape = 's32[2]{0}', space=sflag, size = 0x8, scoped, tag = 'scoped memory for tpu_custom_call.1']
    %12 = vsyncpa [#allocation3], 0
    %s13 = scalar_lea.sflag [#allocation3], 1
    %14 = vsyncpa %s13, 0
    loop: start=0, step=1, limit=4
    $region2: #{tpu_custom_call.1} parent=1 // loop_pre_header
      _
    $region3: #{tpu_custom_call.1} parent=1 // loop_header
      %s16 = sphi 0, %s20
      %p17 = scmp.ge.s32.totalorder %s16, 4
      %s23 = sphi 0, %s35
      %s24 = sphi 0, %s31
      %s25 = sphi 0, %s23
      %s26 = sphi 0, %s24
      %s27 = sphi 0, %s25
      %s28 = sphi 0, %s26
      %s40 = sphi 0, %s42
      %s43 = sphi 0, %s40
      %s44 = sphi 0, %s43
      %s60 = sphi 0, %s44
      %s64 = sphi 0, %s64
      %s66 = sphi 0, %s64
      %s67 = sphi 0, %s66
      %s81 = sphi 0, %s67
      %s85 = sphi 0, %s85
      %s87 = sphi 0, %s85
      %s88 = sphi 0, %s87
      %s102 = sphi 0, %s88
      %s106 = sphi 0, %s106
      %s108 = sphi 0, %s106
      %s109 = sphi 0, %s108
      %s123 = sphi 0, %s109
      %s127 = sphi 0, %s127
      %s129 = sphi 0, %s127
      %s130 = sphi 0, %s129
      %s144 = sphi 0, %s130
      %s148 = sphi 0, %s148
      %s150 = sphi 0, %s148
      %s151 = sphi 0, %s150
      %s165 = sphi 0, %s151
      %s169 = sphi 0, %s169
      %s171 = sphi 0, %s169
      %s172 = sphi 0, %s171
      %s186 = sphi 0, %s172
      %s194 = sphi 0, %s196
      %s197 = sphi 0, %s194
      %s198 = sphi 0, %s197
      %s214 = sphi 0, %s198
    $region4: #{tpu_custom_call.1} parent=1 // loop_header_branch
      %19 = sbr.rel (%p17) target = $region8
    $region5: #{tpu_custom_call.1} parent=1 // loop_body
      %s21 = ssub.s32 %s16, 1
      %s22 = ssub.s32 %s16, 2
      %s29 = sadd.s32 1, %s24
      %p30 = scmp.ge.s32.totalorder %s29, 1
      %s31 = scalar_select %p30, 0, %s29
      %s32 = sadd.s32 1, %s23
      %s33 = scalar_select %p30, %s32, %s23
      %p34 = scmp.ge.s32.totalorder %s33, 2
      %s35 = scalar_select %p34, 0, %s33
      %s36 = ssub.s32 %s23, %s35
      %s37 = ssub.s32 %s24, %s31
      %s38 = sor.u32 %s36, %s37
      %p39 = scmp.eq.s32.totalorder %s38, 0
      %s41 = sadd.s32 %s40, 1
      %s42 = scalar_select %p39, %s40, %s41
      %p45 = pneg %p39
      %p46 = scmp.eq.s32.totalorder %s16, 1
      %p47 = por %p45, %p46
      %p48 = scmp.ne.s32.totalorder %s40, %s43
      %p49 = scmp.eq.s32.totalorder %s16, 0
      %p50 = por %p48, %p49
      %p51 = scmp.ne.s32.totalorder %s40, %s43
      %p52 = scmp.eq.s32.totalorder %s21, 1
      %p53 = por %p51, %p52
      %p54 = scmp.ne.s32.totalorder %s43, %s44
      %p55 = scmp.eq.s32.totalorder %s21, 0
      %p56 = por %p54, %p55
      %p57 = scmp.ne.s32.totalorder %s43, %s44
      %p58 = scmp.eq.s32.totalorder %s22, 1
      %p59 = por %p57, %p58
      %p61 = scmp.ne.s32.totalorder %s44, %s60
      %p62 = scmp.eq.s32.totalorder %s22, 0
      %p63 = por %p61, %p62
      %s65 = sadd.s32 %s64, 1
      %p68 = scmp.eq.s32.totalorder %s16, 1
      %p69 = scmp.ne.s32.totalorder %s64, %s66
      %p70 = scmp.eq.s32.totalorder %s16, 0
      %p71 = por %p69, %p70
      %p72 = scmp.ne.s32.totalorder %s64, %s66
      %p73 = scmp.eq.s32.totalorder %s21, 1
      %p74 = por %p72, %p73
      %p75 = scmp.ne.s32.totalorder %s66, %s67
      %p76 = scmp.eq.s32.totalorder %s21, 0
      %p77 = por %p75, %p76
      %p78 = scmp.ne.s32.totalorder %s66, %s67
      %p79 = scmp.eq.s32.totalorder %s22, 1
      %p80 = por %p78, %p79
      %p82 = scmp.ne.s32.totalorder %s67, %s81
      %p83 = scmp.eq.s32.totalorder %s22, 0
      %p84 = por %p82, %p83
      %s86 = sadd.s32 %s85, 1
      %p89 = scmp.eq.s32.totalorder %s16, 1
      %p90 = scmp.ne.s32.totalorder %s85, %s87
      %p91 = scmp.eq.s32.totalorder %s16, 0
      %p92 = por %p90, %p91
      %p93 = scmp.ne.s32.totalorder %s85, %s87
      %p94 = scmp.eq.s32.totalorder %s21, 1
      %p95 = por %p93, %p94
      %p96 = scmp.ne.s32.totalorder %s87, %s88
      %p97 = scmp.eq.s32.totalorder %s21, 0
      %p98 = por %p96, %p97
      %p99 = scmp.ne.s32.totalorder %s87, %s88
      %p100 = scmp.eq.s32.totalorder %s22, 1
      %p101 = por %p99, %p100
      %p103 = scmp.ne.s32.totalorder %s88, %s102
      %p104 = scmp.eq.s32.totalorder %s22, 0
      %p105 = por %p103, %p104
      %s107 = sadd.s32 %s106, 1
      %p110 = scmp.eq.s32.totalorder %s16, 1
      %p111 = scmp.ne.s32.totalorder %s106, %s108
      %p112 = scmp.eq.s32.totalorder %s16, 0
      %p113 = por %p111, %p112
      %p114 = scmp.ne.s32.totalorder %s106, %s108
      %p115 = scmp.eq.s32.totalorder %s21, 1
      %p116 = por %p114, %p115
      %p117 = scmp.ne.s32.totalorder %s108, %s109
      %p118 = scmp.eq.s32.totalorder %s21, 0
      %p119 = por %p117, %p118
      %p120 = scmp.ne.s32.totalorder %s108, %s109
      %p121 = scmp.eq.s32.totalorder %s22, 1
      %p122 = por %p120, %p121
      %p124 = scmp.ne.s32.totalorder %s109, %s123
      %p125 = scmp.eq.s32.totalorder %s22, 0
      %p126 = por %p124, %p125
      %s128 = sadd.s32 %s127, 1
      %p131 = scmp.eq.s32.totalorder %s16, 1
      %p132 = scmp.ne.s32.totalorder %s127, %s129
      %p133 = scmp.eq.s32.totalorder %s16, 0
      %p134 = por %p132, %p133
      %p135 = scmp.ne.s32.totalorder %s127, %s129
      %p136 = scmp.eq.s32.totalorder %s21, 1
      %p137 = por %p135, %p136
      %p138 = scmp.ne.s32.totalorder %s129, %s130
      %p139 = scmp.eq.s32.totalorder %s21, 0
      %p140 = por %p138, %p139
      %p141 = scmp.ne.s32.totalorder %s129, %s130
      %p142 = scmp.eq.s32.totalorder %s22, 1
      %p143 = por %p141, %p142
      %p145 = scmp.ne.s32.totalorder %s130, %s144
      %p146 = scmp.eq.s32.totalorder %s22, 0
      %p147 = por %p145, %p146
      %s149 = sadd.s32 %s148, 1
      %p152 = scmp.eq.s32.totalorder %s16, 1
      %p153 = scmp.ne.s32.totalorder %s148, %s150
      %p154 = scmp.eq.s32.totalorder %s16, 0
      %p155 = por %p153, %p154
      %p156 = scmp.ne.s32.totalorder %s148, %s150
      %p157 = scmp.eq.s32.totalorder %s21, 1
      %p158 = por %p156, %p157
      %p159 = scmp.ne.s32.totalorder %s150, %s151
      %p160 = scmp.eq.s32.totalorder %s21, 0
      %p161 = por %p159, %p160
      %p162 = scmp.ne.s32.totalorder %s150, %s151
      %p163 = scmp.eq.s32.totalorder %s22, 1
      %p164 = por %p162, %p163
      %p166 = scmp.ne.s32.totalorder %s151, %s165
      %p167 = scmp.eq.s32.totalorder %s22, 0
      %p168 = por %p166, %p167
      %s170 = sadd.s32 %s169, 1
      %p173 = scmp.eq.s32.totalorder %s16, 1
      %p174 = scmp.ne.s32.totalorder %s169, %s171
      %p175 = scmp.eq.s32.totalorder %s16, 0
      %p176 = por %p174, %p175
      %p177 = scmp.ne.s32.totalorder %s169, %s171
      %p178 = scmp.eq.s32.totalorder %s21, 1
      %p179 = por %p177, %p178
      %p180 = scmp.ne.s32.totalorder %s171, %s172
      %p181 = scmp.eq.s32.totalorder %s21, 0
      %p182 = por %p180, %p181
      %p183 = scmp.ne.s32.totalorder %s171, %s172
      %p184 = scmp.eq.s32.totalorder %s22, 1
      %p185 = por %p183, %p184
      %p187 = scmp.ne.s32.totalorder %s172, %s186
      %p188 = scmp.eq.s32.totalorder %s22, 0
      %p189 = por %p187, %p188
      %s190 = ssub.s32 %s23, %s35
      %s191 = ssub.s32 %s24, %s31
      %s192 = sor.u32 %s190, %s191
      %p193 = scmp.eq.s32.totalorder %s192, 0
      %s195 = sadd.s32 %s194, 1
      %s196 = scalar_select %p193, %s194, %s195
      %p199 = pneg %p193
      %p200 = scmp.eq.s32.totalorder %s16, 1
      %p201 = por %p199, %p200
      %p202 = scmp.ne.s32.totalorder %s194, %s197
      %p203 = scmp.eq.s32.totalorder %s16, 0
      %p204 = por %p202, %p203
      %p205 = scmp.ne.s32.totalorder %s194, %s197
      %p206 = scmp.eq.s32.totalorder %s21, 1
      %p207 = por %p205, %p206
      %p208 = scmp.ne.s32.totalorder %s197, %s198
      %p209 = scmp.eq.s32.totalorder %s21, 0
      %p210 = por %p208, %p209
      %p211 = scmp.ne.s32.totalorder %s197, %s198
      %p212 = scmp.eq.s32.totalorder %s22, 1
      %p213 = por %p211, %p212
      %p215 = scmp.ne.s32.totalorder %s198, %s214
      %p216 = scmp.eq.s32.totalorder %s22, 0
      %p217 = por %p215, %p216
      %p218 = scmp.le.s32.totalorder 1, %s16
      %p219 = scmp.lt.s32.totalorder %s16, 3
      %p220 = pnand %p218, %p219
      %p221 = pneg %p220
      // Predicated region
      $region9: #{tpu_custom_call.1} parent=5 // pred_check
        _
      $region10: #{tpu_custom_call.1} parent=5 // pred_check_branch
        %223 = sbr.rel (%p220) target = $region12
      $region11: #{tpu_custom_call.1} parent=5 // pred_region
        %s224 = ssub.s32 %s16, 1
        // Predicated region
        $region13: #{tpu_custom_call.1} parent=11 // pred_check
          %p225 = pneg %p77
        $region14: #{tpu_custom_call.1} parent=11 // pred_check_branch
          %227 = sbr.rel (%p225) target = $region16
        $region15: #{tpu_custom_call.1} parent=11 // pred_region
          _
        $region16: #{tpu_custom_call.1} parent=11 // pred_fallthru
          _
        // Predicated region
        $region17: #{tpu_custom_call.1} parent=11 // pred_check
          %p228 = pneg %p98
        $region18: #{tpu_custom_call.1} parent=11 // pred_check_branch
          %230 = sbr.rel (%p228) target = $region20
        $region19: #{tpu_custom_call.1} parent=11 // pred_region
          _
        $region20: #{tpu_custom_call.1} parent=11 // pred_fallthru
          _
        // Predicated region
        $region21: #{tpu_custom_call.1} parent=11 // pred_check
          %p231 = pneg %p119
        $region22: #{tpu_custom_call.1} parent=11 // pred_check_branch
          %233 = sbr.rel (%p231) target = $region24
        $region23: #{tpu_custom_call.1} parent=11 // pred_region
          _
        $region24: #{tpu_custom_call.1} parent=11 // pred_fallthru
          _
        // Predicated region
        $region25: #{tpu_custom_call.1} parent=11 // pred_check
          %p234 = pneg %p140
        $region26: #{tpu_custom_call.1} parent=11 // pred_check_branch
          %236 = sbr.rel (%p234) target = $region28
        $region27: #{tpu_custom_call.1} parent=11 // pred_region
          _
        $region28: #{tpu_custom_call.1} parent=11 // pred_fallthru
          _
        // Predicated region
        $region29: #{tpu_custom_call.1} parent=11 // pred_check
          %p237 = pneg %p161
        $region30: #{tpu_custom_call.1} parent=11 // pred_check_branch
          %239 = sbr.rel (%p237) target = $region32
        $region31: #{tpu_custom_call.1} parent=11 // pred_region
          _
        $region32: #{tpu_custom_call.1} parent=11 // pred_fallthru
          _
        // Predicated region
        $region33: #{tpu_custom_call.1} parent=11 // pred_check
          %p240 = pneg %p182
        $region34: #{tpu_custom_call.1} parent=11 // pred_check_branch
          %242 = sbr.rel (%p240) target = $region36
        $region35: #{tpu_custom_call.1} parent=11 // pred_region
          _
        $region36: #{tpu_custom_call.1} parent=11 // pred_fallthru
          _
      $region12: #{tpu_custom_call.1} parent=5 // pred_fallthru
        _
      %p243 = scmp.lt.s32.totalorder %s16, 2
      // Predicated region
      $region37: #{tpu_custom_call.1} parent=5 // pred_check
        %p244 = pneg %p243
      $region38: #{tpu_custom_call.1} parent=5 // pred_check_branch
        %246 = sbr.rel (%p244) target = $region40
      $region39: #{tpu_custom_call.1} parent=5 // pred_region
        // Predicated region
        $region41: #{tpu_custom_call.1} parent=39 // pred_check
          %p247 = pneg %p50
        $region42: #{tpu_custom_call.1} parent=39 // pred_check_branch
          %249 = sbr.rel (%p247) target = $region44
        $region43: #{tpu_custom_call.1} parent=39 // pred_region
          %p250 = scmp.lt.s32.totalorder %s23, 1
          %s251 = scalar_select %p250, %s23, 1
          %p252 = scmp.lt.s32.totalorder %s24, 0
          %s253 = scalar_select %p252, %s24, 0
          %s254 = sadd.s32 %s253, %s251
          %s255 = smul.addr %s254, 8
          %s256 = scalar_lea.vmem %s0, %s255
        $region44: #{tpu_custom_call.1} parent=39 // pred_fallthru
          _
      $region40: #{tpu_custom_call.1} parent=5 // pred_fallthru
        _
      %p257 = scmp.le.s32.totalorder 1, %s16
      %p258 = scmp.lt.s32.totalorder %s16, 3
      %p259 = pnand %p257, %p258
      %p260 = pneg %p259
      // Predicated region
      $region45: #{tpu_custom_call.1} parent=5 // pred_check
        _
      $region46: #{tpu_custom_call.1} parent=5 // pred_check_branch
        %262 = sbr.rel (%p259) target = $region48
      $region47: #{tpu_custom_call.1} parent=5 // pred_region
        %s263 = ssub.s32 %s16, 1
        %p264 = scmp.lt.s32.totalorder %s25, 1
        %s265 = scalar_select %p264, %s25, 1
        %p266 = scmp.lt.s32.totalorder %s26, 0
        %s267 = scalar_select %p266, %s26, 0
        %s268 = sadd.s32 %s267, %s265
        %s269 = smul.addr %s268, 8
        %s270 = scalar_lea.vmem %s0, %s269
        %p271 = pneg %p56
        %p272 = pneg %p53
        %p273 = pneg %p77
        %p274 = pneg %p74
        %p275 = pneg %p98
        %p276 = pneg %p95
        %p277 = pneg %p119
        %p278 = pneg %p116
        %p279 = pneg %p140
        %p280 = pneg %p137
        %p281 = pneg %p161
        %p282 = pneg %p158
        %p283 = pneg %p182
        %p284 = pneg %p179
        %p285 = pneg %p210
        %p286 = pneg %p207
        %s287 = sand.u32 %s197, 1
        %s288 = scalar_lea.sflag [#allocation3], %s287
        %s289 = sand.u32 %s197, 1
        %s290 = smul.addr %s289, 8
        %s291 = scalar_lea.vmem [#allocation2], %s290
        %p292 = scmp.lt.s32.totalorder %s25, 1
        %s293 = scalar_select %p292, %s25, 1
        %p294 = scmp.lt.s32.totalorder %s26, 0
        %s295 = scalar_select %p294, %s26, 0
        %s296 = sadd.s32 %s295, %s293
        %s297 = smul.addr %s296, 8
        %s298 = scalar_lea.vmem %s0, %s297
        %v300 = vld [vmem:[%s298] sm:$0xff]
        %v301 = vld [vmem:[%s1] sm:$0xf]
        %v302 = vld [vmem:[%s1 + $0x4] sm:$0xf]
        %v303 = vpack.c.bf16 %v300, %v300
        %v304 = vld [vmem:[%s2] sm:$0xff]
        %v305 = vld [vmem:[%s2 + $0x8] sm:$0xff]
        %307 = vset.pattern.permute.xlu0 0
        %308 = vperm.xlu0 %307, %v304
        %v309 = vpop.permute.xlu0 %308
        %312 = vset.pattern.permute.xlu0 0
        %313 = vperm.xlu0 %312, %v305
        %v314 = vpop.permute.xlu0 %313
        %v318 = vunpack.c.l.b16 %v301
        %v319 = vunpack.c.l.b16 %v302
        %v320 = vpack.c.b16 %v319, %v318
        %vm321 = vcmask 64512
        %v323 = vsel %vm321, %v320, 0
        %vm325 = vcmask 1043456
        %v327 = vsel %vm325, %v303, 0
        %329 = vmatprep.subr.bf16.mxu0 0
        %330 = vmatpush1.bf16.msra.mxu0 %v327
        %331 = vmatprep.subr.bf16.mxu0 0
        %332 = vmatpush1.bf16.msra.mxu0 0
        %333 = vmatprep.subr.bf16.mxu0 0
        %334 = vmatpush1.bf16.msra.mxu0 0
        %335 = vmatprep.subr.bf16.mxu0 0
        %336 = vmatpush1.bf16.msra.mxu0 0
        %337 = vmatprep.subr.bf16.mxu0 0
        %338 = vmatpush1.bf16.msra.mxu0 0
        %339 = vmatprep.subr.bf16.mxu0 0
        %340 = vmatpush1.bf16.msra.mxu0 0
        %341 = vmatprep.subr.bf16.mxu0 0
        %342 = vmatpush1.bf16.msra.mxu0 0
        %343 = vmatprep.subr.bf16.mxu0 0
        %344 = vmatpush1.bf16.msra.mxu0 0
        %345 = vmatprep.subr.bf16.mxu0 0
        %346 = vmatpush1.bf16.msra.mxu0 0
        %347 = vmatprep.subr.bf16.mxu0 0
        %348 = vmatpush1.bf16.msra.mxu0 0
        %349 = vmatprep.subr.bf16.mxu0 0
        %350 = vmatpush1.bf16.msra.mxu0 0
        %351 = vmatprep.subr.bf16.mxu0 0
        %352 = vmatpush1.bf16.msra.mxu0 0
        %353 = vmatprep.subr.bf16.mxu0 0
        %354 = vmatpush1.bf16.msra.mxu0 0
        %355 = vmatprep.subr.bf16.mxu0 0
        %356 = vmatpush1.bf16.msra.mxu0 0
        %357 = vmatprep.subr.bf16.mxu0 0
        %358 = vmatpush1.bf16.msra.mxu0 0
        %359 = vmatprep.subr.bf16.mxu0 0
        %360 = vmatpush1.bf16.msra.mxu0 0
        %361 = vmatprep.mubr.bf16.mxu0 0
        %362 = vmatmul.mubr.bf16.gmra.mrb[0].mxu0 %v323
        %v363 = vpop.f32.mrb[0].mxu0
        %v364 = vadd.f32 %v309, %v363
        %v365 = vpop.f32.mrb[0].mxu0
        %v366 = vpop.f32.mrb[0].mxu0
        %v367 = vadd.f32 %v314, %v366
        %v368 = vpop.f32.mrb[0].mxu0
        %369 = vdwg.mxu0
        %vm370 = vcmask 261120
        %v371 = vsel %vm370, %v364, 0.0
        %v372 = vsel %vm370, %v367, 0.0
        %v373 = vadd.f32 %v371, %v372
        %v374 = vrot.slane %v373, 4
        %v375 = vadd.f32 %v373, %v374
        %v376 = vrot.slane %v375, 2
        %v377 = vadd.f32 %v375, %v376
        %v378 = vrot.slane %v377, 1
        %v379 = vadd.f32 %v377, %v378
        %v380 = vrcp.pop 16.0
        %v381 = vmul.f32 %v379, %v380
        %v382 = vsub.f32 %v364, %v381
        %v383 = vsub.f32 %v367, %v381
        %v384 = vmul.f32 %v382, %v382
        %v385 = vmul.f32 %v383, %v383
        %v386 = vsel %vm370, %v384, 0.0
        %v387 = vsel %vm370, %v385, 0.0
        %v388 = vadd.f32 %v386, %v387
        %v389 = vrot.slane %v388, 4
        %v390 = vadd.f32 %v388, %v389
        %v391 = vrot.slane %v390, 2
        %v392 = vadd.f32 %v390, %v391
        %v393 = vrot.slane %v392, 1
        %v394 = vadd.f32 %v392, %v393
        %v395 = vmul.f32 %v394, %v380
        %v396 = vadd.f32 %v395, 1e-05
        %v397 = vrsqrt.pop %v396
        %v398 = vmul.f32 %v382, %v397
        %v399 = vmul.f32 %v383, %v397
        %400 = vset.pattern.permute.xlu0 1
        %401 = vperm.xlu0 %400, %v304
        %v402 = vpop.permute.xlu0 %401
        %404 = vset.pattern.permute.xlu0 1
        %405 = vperm.xlu0 %404, %v305
        %v406 = vpop.permute.xlu0 %405
        %v408 = vmul.f32 %v398, %v402
        %v409 = vmul.f32 %v399, %v406
        %410 = vset.pattern.permute.xlu0 2
        %411 = vperm.xlu0 %410, %v304
        %v412 = vpop.permute.xlu0 %411
        %414 = vset.pattern.permute.xlu0 2
        %415 = vperm.xlu0 %414, %v305
        %v416 = vpop.permute.xlu0 %415
        %v418 = vadd.f32 %v408, %v412
        %v419 = vadd.f32 %v409, %v416
        %v420 = vmul.f32 %v418, 0.5
        %v421 = vmul.f32 %v419, 0.5
        %v422 = vmul.f32 %v418, 0.70710677
        %v423 = vmul.f32 %v419, 0.70710677
        %v424 = verf.f32.pop %v422
        %v425 = verf.f32.pop %v423
        %v426 = vadd.f32 %v424, 1.0
        %v427 = vadd.f32 %v425, 1.0
        %v428 = vmul.f32 %v420, %v426
        %v429 = vmul.f32 %v421, %v427
        %v430 = vld [vmem:[%s3] sm:$0xf]
        %v431 = vld [vmem:[%s3 + $0x4] sm:$0xf]
        %v432 = vpack.c.bf16 %v429, %v428
        %v433 = vld [vmem:[%s4] sm:$0xff]
        %v434 = vld [vmem:[%s4 + $0x8] sm:$0xff]
        %436 = vset.pattern.permute.xlu0 0
        %437 = vperm.xlu0 %436, %v433
        %v438 = vpop.permute.xlu0 %437
        %441 = vset.pattern.permute.xlu0 0
        %442 = vperm.xlu0 %441, %v434
        %v443 = vpop.permute.xlu0 %442
        %v447 = vunpack.c.l.b16 %v430
        %v448 = vunpack.c.l.b16 %v431
        %v449 = vpack.c.b16 %v448, %v447
        %vm450 = vcmask 130048
        %v452 = vsel %vm450, %v449, 0
        %454 = vmatprep.subr.bf16.mxu0 0
        %455 = vmatpush1.bf16.msra.mxu0 %v432
        %456 = vmatprep.subr.bf16.mxu0 0
        %457 = vmatpush1.bf16.msra.mxu0 0
        %458 = vmatprep.subr.bf16.mxu0 0
        %459 = vmatpush1.bf16.msra.mxu0 0
        %460 = vmatprep.subr.bf16.mxu0 0
        %461 = vmatpush1.bf16.msra.mxu0 0
        %462 = vmatprep.subr.bf16.mxu0 0
        %463 = vmatpush1.bf16.msra.mxu0 0
        %464 = vmatprep.subr.bf16.mxu0 0
        %465 = vmatpush1.bf16.msra.mxu0 0
        %466 = vmatprep.subr.bf16.mxu0 0
        %467 = vmatpush1.bf16.msra.mxu0 0
        %468 = vmatprep.subr.bf16.mxu0 0
        %469 = vmatpush1.bf16.msra.mxu0 0
        %470 = vmatprep.subr.bf16.mxu0 0
        %471 = vmatpush1.bf16.msra.mxu0 0
        %472 = vmatprep.subr.bf16.mxu0 0
        %473 = vmatpush1.bf16.msra.mxu0 0
        %474 = vmatprep.subr.bf16.mxu0 0
        %475 = vmatpush1.bf16.msra.mxu0 0
        %476 = vmatprep.subr.bf16.mxu0 0
        %477 = vmatpush1.bf16.msra.mxu0 0
        %478 = vmatprep.subr.bf16.mxu0 0
        %479 = vmatpush1.bf16.msra.mxu0 0
        %480 = vmatprep.subr.bf16.mxu0 0
        %481 = vmatpush1.bf16.msra.mxu0 0
        %482 = vmatprep.subr.bf16.mxu0 0
        %483 = vmatpush1.bf16.msra.mxu0 0
        %484 = vmatprep.subr.bf16.mxu0 0
        %485 = vmatpush1.bf16.msra.mxu0 0
        %486 = vmatprep.mubr.bf16.mxu0 0
        %487 = vmatmul.mubr.bf16.gmra.mrb[0].mxu0 %v452
        %v488 = vpop.f32.mrb[0].mxu0
        %v489 = vadd.f32 %v438, %v488
        %v490 = vpop.f32.mrb[0].mxu0
        %v491 = vpop.f32.mrb[0].mxu0
        %v492 = vadd.f32 %v443, %v491
        %v493 = vpop.f32.mrb[0].mxu0
        %494 = vdwg.mxu0
        %v495 = vsel %vm370, %v489, 0.0
        %v496 = vsel %vm370, %v492, 0.0
        %v497 = vadd.f32 %v495, %v496
        %v498 = vrot.slane %v497, 4
        %v499 = vadd.f32 %v497, %v498
        %v500 = vrot.slane %v499, 2
        %v501 = vadd.f32 %v499, %v500
        %v502 = vrot.slane %v501, 1
        %v503 = vadd.f32 %v501, %v502
        %v504 = vmul.f32 %v503, %v380
        %v505 = vsub.f32 %v489, %v504
        %v506 = vsub.f32 %v492, %v504
        %v507 = vmul.f32 %v505, %v505
        %v508 = vmul.f32 %v506, %v506
        %v509 = vsel %vm370, %v507, 0.0
        %v510 = vsel %vm370, %v508, 0.0
        %v511 = vadd.f32 %v509, %v510
        %v512 = vrot.slane %v511, 4
        %v513 = vadd.f32 %v511, %v512
        %v514 = vrot.slane %v513, 2
        %v515 = vadd.f32 %v513, %v514
        %v516 = vrot.slane %v515, 1
        %v517 = vadd.f32 %v515, %v516
        %v518 = vmul.f32 %v517, %v380
        %v519 = vadd.f32 %v518, 1e-05
        %v520 = vrsqrt.pop %v519
        %v521 = vmul.f32 %v505, %v520
        %v522 = vmul.f32 %v506, %v520
        %523 = vset.pattern.permute.xlu0 1
        %524 = vperm.xlu0 %523, %v433
        %v525 = vpop.permute.xlu0 %524
        %527 = vset.pattern.permute.xlu0 1
        %528 = vperm.xlu0 %527, %v434
        %v529 = vpop.permute.xlu0 %528
        %v531 = vmul.f32 %v521, %v525
        %v532 = vmul.f32 %v522, %v529
        %533 = vset.pattern.permute.xlu0 2
        %534 = vperm.xlu0 %533, %v433
        %v535 = vpop.permute.xlu0 %534
        %537 = vset.pattern.permute.xlu0 2
        %538 = vperm.xlu0 %537, %v434
        %v539 = vpop.permute.xlu0 %538
        %v541 = vadd.f32 %v531, %v535
        %v542 = vadd.f32 %v532, %v539
        %v543 = vmul.f32 %v541, 0.5
        %v544 = vmul.f32 %v542, 0.5
        %v545 = vmul.f32 %v541, 0.70710677
        %v546 = vmul.f32 %v542, 0.70710677
        %v547 = verf.f32.pop %v545
        %v548 = verf.f32.pop %v546
        %v549 = vadd.f32 %v547, 1.0
        %v550 = vadd.f32 %v548, 1.0
        %v551 = vmul.f32 %v543, %v549
        %v552 = vmul.f32 %v544, %v550
        %v553 = vld [vmem:[%s5] sm:$0xf]
        %v554 = vpack.c.bf16 %v552, %v551
        %v555 = vld [vmem:[%s6] sm:$0xff]
        %557 = vset.pattern.permute.xlu0 0
        %558 = vperm.xlu0 %557, %v555
        %v559 = vpop.permute.xlu0 %558
        %v562 = vsel %vm450, %v553, 0
        %564 = vmatprep.subr.bf16.mxu0 0
        %565 = vmatpush1.bf16.msra.mxu0 %v554
        %566 = vmatprep.subr.bf16.mxu0 0
        %567 = vmatpush1.bf16.msra.mxu0 0
        %568 = vmatprep.subr.bf16.mxu0 0
        %569 = vmatpush1.bf16.msra.mxu0 0
        %570 = vmatprep.subr.bf16.mxu0 0
        %571 = vmatpush1.bf16.msra.mxu0 0
        %572 = vmatprep.subr.bf16.mxu0 0
        %573 = vmatpush1.bf16.msra.mxu0 0
        %574 = vmatprep.subr.bf16.mxu0 0
        %575 = vmatpush1.bf16.msra.mxu0 0
        %576 = vmatprep.subr.bf16.mxu0 0
        %577 = vmatpush1.bf16.msra.mxu0 0
        %578 = vmatprep.subr.bf16.mxu0 0
        %579 = vmatpush1.bf16.msra.mxu0 0
        %580 = vmatprep.subr.bf16.mxu0 0
        %581 = vmatpush1.bf16.msra.mxu0 0
        %582 = vmatprep.subr.bf16.mxu0 0
        %583 = vmatpush1.bf16.msra.mxu0 0
        %584 = vmatprep.subr.bf16.mxu0 0
        %585 = vmatpush1.bf16.msra.mxu0 0
        %586 = vmatprep.subr.bf16.mxu0 0
        %587 = vmatpush1.bf16.msra.mxu0 0
        %588 = vmatprep.subr.bf16.mxu0 0
        %589 = vmatpush1.bf16.msra.mxu0 0
        %590 = vmatprep.subr.bf16.mxu0 0
        %591 = vmatpush1.bf16.msra.mxu0 0
        %592 = vmatprep.subr.bf16.mxu0 0
        %593 = vmatpush1.bf16.msra.mxu0 0
        %594 = vmatprep.subr.bf16.mxu0 0
        %595 = vmatpush1.bf16.msra.mxu0 0
        %596 = vmatprep.mubr.bf16.mxu0 0
        %597 = vmatmul.mubr.bf16.gmra.mrb[0].mxu0 %v562
        %v598 = vpop.f32.mrb[0].mxu0
        %v599 = vadd.f32 %v559, %v598
        %v600 = vpop.f32.mrb[0].mxu0
        %v601 = vpop.f32.mrb[0].mxu0
        %v602 = vpop.f32.mrb[0].mxu0
        %603 = vdwg.mxu0
        %v604 = vsel %vm370, %v599, 0.0
        %v605 = vrot.slane %v604, 4
        %v606 = vadd.f32 %v604, %v605
        %v607 = vrot.slane %v606, 2
        %v608 = vadd.f32 %v606, %v607
        %v609 = vrot.slane %v608, 1
        %v610 = vadd.f32 %v608, %v609
        %v611 = vrcp.pop 8.0
        %v612 = vmul.f32 %v610, %v611
        %v613 = vsub.f32 %v599, %v612
        %v614 = vmul.f32 %v613, %v613
        %v615 = vsel %vm370, %v614, 0.0
        %v616 = vrot.slane %v615, 4
        %v617 = vadd.f32 %v615, %v616
        %v618 = vrot.slane %v617, 2
        %v619 = vadd.f32 %v617, %v618
        %v620 = vrot.slane %v619, 1
        %v621 = vadd.f32 %v619, %v620
        %v622 = vmul.f32 %v621, %v611
        %v623 = vadd.f32 %v622, 1e-05
        %v624 = vrsqrt.pop %v623
        %v625 = vmul.f32 %v613, %v624
        %626 = vset.pattern.permute.xlu0 1
        %627 = vperm.xlu0 %626, %v555
        %v628 = vpop.permute.xlu0 %627
        %v630 = vmul.f32 %v625, %v628
        %631 = vset.pattern.permute.xlu0 2
        %632 = vperm.xlu0 %631, %v555
        %v633 = vpop.permute.xlu0 %632
        %v635 = vadd.f32 %v630, %v633
        %v636 = vadd.f32 %v635, %v300
        %637 = vst.msk [vmem:[%s291] sm:$0xff] %vm370, %v636
        %s638 = sand.u32 %s197, 1
        %s639 = scalar_lea.sflag [#allocation3], %s638
        %s640 = sand.u32 %s197, 1
        %s641 = smul.addr %s640, 8
        %s642 = scalar_lea.vmem [#allocation2], %s641
        // Predicated region
        $region49: #{tpu_custom_call.1} parent=47 // pred_check
          %p643 = pneg %p207
        $region50: #{tpu_custom_call.1} parent=47 // pred_check_branch
          %645 = sbr.rel (%p643) target = $region52
        $region51: #{tpu_custom_call.1} parent=47 // pred_region
          %s647 = ssub.s32 128, 128
          %648 = vsyncadd %s639, %s647
          %s649 = sadd.s32 %s26, %s25
          %s650 = smul.addr %s649, 128
          %s651 = scalar_lea.hbm %s7, %s650
          %s653 = sshll.u32 %s642, 4
          %s654 = int_to_ptr.vmem [resolvable:$true] %s653
          %656 = dma.vmem_to_hbm [thread:$0]  %s654, 128, %s651, %s639
        $region52: #{tpu_custom_call.1} parent=47 // pred_fallthru
          _
      $region48: #{tpu_custom_call.1} parent=5 // pred_fallthru
        _
      %p657 = scmp.le.s32.totalorder 2, %s16
      // Predicated region
      $region53: #{tpu_custom_call.1} parent=5 // pred_check
        %p658 = pneg %p657
      $region54: #{tpu_custom_call.1} parent=5 // pred_check_branch
        %660 = sbr.rel (%p658) target = $region56
      $region55: #{tpu_custom_call.1} parent=5 // pred_region
        %s661 = ssub.s32 %s16, 2
        // Predicated region
        $region57: #{tpu_custom_call.1} parent=55 // pred_check
          %p662 = pneg %p213
        $region58: #{tpu_custom_call.1} parent=55 // pred_check_branch
          %664 = sbr.rel (%p662) target = $region60
        $region59: #{tpu_custom_call.1} parent=55 // pred_region
          %s665 = sand.u32 %s198, 1
          %s666 = scalar_lea.sflag [#allocation3], %s665
          %s667 = sand.u32 %s198, 1
          %s668 = smul.addr %s667, 8
          %s669 = scalar_lea.vmem [#allocation2], %s668
          %670 = dma.done %s666, 128
        $region60: #{tpu_custom_call.1} parent=55 // pred_fallthru
          _
      $region56: #{tpu_custom_call.1} parent=5 // pred_fallthru
        _
    $region6: #{tpu_custom_call.1} parent=1 // loop_footer
      %s20 = sadd.s32 1, %s16
    $region7: #{tpu_custom_call.1} parent=1 // loop_footer_branch
      %15 = sbr.rel target = $region3
    $region8: #{tpu_custom_call.1} parent=1 // loop_exit
      _
    %671 = vsyncpa [#allocation3], 1
    %s672 = scalar_lea.sflag [#allocation3], 1
    %673 = vsyncpa %s672, 1

// kernel: tpu_custom_call.1
$region0: #{tpu_custom_call.1}
  #allocation0 [shape = 'u32[]', space=smem, size = 0x4, offset = 0x4, fixed_abs, tag = 'smem constant byte address 0x4 - core index']
  #allocation1 [shape = 'u32[144,128]{1,0:T(1,128)}', space=vmem, size = 0x12000, scoped, tag = 'internal scratch']
  %s0 = inlined_call_operand.vmem [shape: f32[2,8,32], index: 0, kind: input, shape index: {}]
  %s1 = inlined_call_operand.vmem [shape: bf16[16,8], index: 1, kind: input, shape index: {}]
  %s2 = inlined_call_operand.vmem [shape: f32[16,3], index: 2, kind: input, shape index: {}]
  %s3 = inlined_call_operand.vmem [shape: bf16[16,16], index: 3, kind: input, shape index: {}]
  %s4 = inlined_call_operand.vmem [shape: f32[16,3], index: 4, kind: input, shape index: {}]
  %s5 = inlined_call_operand.vmem [shape: bf16[8,16], index: 5, kind: input, shape index: {}]
  %s6 = inlined_call_operand.vmem [shape: f32[8,3], index: 6, kind: input, shape index: {}]
  %s7 = inlined_call_operand.hbm [shape: f32[2,8,32], index: 7, kind: output, shape index: {}]
  %s8 = sld [smem:[#allocation0]]
  $region61: #{tpu_custom_call.1} parent=0
    _
  %s10 = ssub.s32 1, %s8
  %s11 = scalar_select 0, %s10, %s8
  $region1: #{tpu_custom_call.1} parent=0
    #allocation2 [shape = 'u8[8192]{0}', space=vmem, size = 0x2000, scoped, tag = 'output window, operand 0']
    #allocation3 [shape = 's32[2]{0}', space=sflag, size = 0x8, scoped, tag = 'scoped memory for tpu_custom_call.1']
    %12 = vsyncpa [#allocation3], 0
    %s13 = scalar_lea.sflag [#allocation3], 1
    %14 = vsyncpa %s13, 0
    loop: start=0, step=1, limit=4
    $region2: #{tpu_custom_call.1} parent=1 // loop_pre_header
      _
    $region3: #{tpu_custom_call.1} parent=1 // loop_header
      %s16 = sphi 0, %s20
      %p17 = scmp.ge.s32.totalorder %s16, 4
      %s23 = sphi 0, %s35
      %s24 = sphi 0, %s31
      %s25 = sphi 0, %s23
      %s26 = sphi 0, %s24
      %s27 = sphi 0, %s25
      %s28 = sphi 0, %s26
      %s40 = sphi 0, %s42
      %s43 = sphi 0, %s40
      %s44 = sphi 0, %s43
      %s60 = sphi 0, %s44
      %s64 = sphi 0, %s64
      %s66 = sphi 0, %s64
      %s67 = sphi 0, %s66
      %s81 = sphi 0, %s67
      %s85 = sphi 0, %s85
      %s87 = sphi 0, %s85
      %s88 = sphi 0, %s87
      %s102 = sphi 0, %s88
      %s106 = sphi 0, %s106
      %s108 = sphi 0, %s106
      %s109 = sphi 0, %s108
      %s123 = sphi 0, %s109
      %s127 = sphi 0, %s127
      %s129 = sphi 0, %s127
      %s130 = sphi 0, %s129
      %s144 = sphi 0, %s130
      %s148 = sphi 0, %s148
      %s150 = sphi 0, %s148
      %s151 = sphi 0, %s150
      %s165 = sphi 0, %s151
      %s169 = sphi 0, %s169
      %s171 = sphi 0, %s169
      %s172 = sphi 0, %s171
      %s186 = sphi 0, %s172
      %s194 = sphi 0, %s196
      %s197 = sphi 0, %s194
      %s198 = sphi 0, %s197
      %s214 = sphi 0, %s198
    $region4: #{tpu_custom_call.1} parent=1 // loop_header_branch
      %19 = sbr.rel (%p17) target = $region8
    $region5: #{tpu_custom_call.1} parent=1 // loop_body
      %s21 = ssub.s32 %s16, 1
      %s22 = ssub.s32 %s16, 2
      %s29 = sadd.s32 1, %s24
      %p30 = scmp.ge.s32.totalorder %s29, 1
      %s31 = scalar_select %p30, 0, %s29
      %s32 = sadd.s32 1, %s23
      %s33 = scalar_select %p30, %s32, %s23
      %p34 = scmp.ge.s32.totalorder %s33, 2
      %s35 = scalar_select %p34, 0, %s33
      %s36 = ssub.s32 %s23, %s35
      %s37 = ssub.s32 %s24, %s31
      %s38 = sor.u32 %s36, %s37
      %p39 = scmp.eq.s32.totalorder %s38, 0
      %s41 = sadd.s32 %s40, 1
      %s42 = scalar_select %p39, %s40, %s41
      %p45 = pneg %p39
      %p46 = scmp.eq.s32.totalorder %s16, 1
      %p47 = por %p45, %p46
      %p48 = scmp.ne.s32.totalorder %s40, %s43
      %p49 = scmp.eq.s32.totalorder %s16, 0
      %p50 = por %p48, %p49
      %p51 = scmp.ne.s32.totalorder %s40, %s43
      %p52 = scmp.eq.s32.totalorder %s21, 1
      %p53 = por %p51, %p52
      %p54 = scmp.ne.s32.totalorder %s43, %s44
      %p55 = scmp.eq.s32.totalorder %s21, 0
      %p56 = por %p54, %p55
      %p57 = scmp.ne.s32.totalorder %s43, %s44
      %p58 = scmp.eq.s32.totalorder %s22, 1
      %p59 = por %p57, %p58
      %p61 = scmp.ne.s32.totalorder %s44, %s60
      %p62 = scmp.eq.s32.totalorder %s22, 0
      %p63 = por %p61, %p62
      %s65 = sadd.s32 %s64, 1
      %p68 = scmp.eq.s32.totalorder %s16, 1
      %p69 = scmp.ne.s32.totalorder %s64, %s66
      %p70 = scmp.eq.s32.totalorder %s16, 0
      %p71 = por %p69, %p70
      %p72 = scmp.ne.s32.totalorder %s64, %s66
      %p73 = scmp.eq.s32.totalorder %s21, 1
      %p74 = por %p72, %p73
      %p75 = scmp.ne.s32.totalorder %s66, %s67
      %p76 = scmp.eq.s32.totalorder %s21, 0
      %p77 = por %p75, %p76
      %p78 = scmp.ne.s32.totalorder %s66, %s67
      %p79 = scmp.eq.s32.totalorder %s22, 1
      %p80 = por %p78, %p79
      %p82 = scmp.ne.s32.totalorder %s67, %s81
      %p83 = scmp.eq.s32.totalorder %s22, 0
      %p84 = por %p82, %p83
      %s86 = sadd.s32 %s85, 1
      %p89 = scmp.eq.s32.totalorder %s16, 1
      %p90 = scmp.ne.s32.totalorder %s85, %s87
      %p91 = scmp.eq.s32.totalorder %s16, 0
      %p92 = por %p90, %p91
      %p93 = scmp.ne.s32.totalorder %s85, %s87
      %p94 = scmp.eq.s32.totalorder %s21, 1
      %p95 = por %p93, %p94
      %p96 = scmp.ne.s32.totalorder %s87, %s88
      %p97 = scmp.eq.s32.totalorder %s21, 0
      %p98 = por %p96, %p97
      %p99 = scmp.ne.s32.totalorder %s87, %s88
      %p100 = scmp.eq.s32.totalorder %s22, 1
      %p101 = por %p99, %p100
      %p103 = scmp.ne.s32.totalorder %s88, %s102
      %p104 = scmp.eq.s32.totalorder %s22, 0
      %p105 = por %p103, %p104
      %s107 = sadd.s32 %s106, 1
      %p110 = scmp.eq.s32.totalorder %s16, 1
      %p111 = scmp.ne.s32.totalorder %s106, %s108
      %p112 = scmp.eq.s32.totalorder %s16, 0
      %p113 = por %p111, %p112
      %p114 = scmp.ne.s32.totalorder %s106, %s108
      %p115 = scmp.eq.s32.totalorder %s21, 1
      %p116 = por %p114, %p115
      %p117 = scmp.ne.s32.totalorder %s108, %s109
      %p118 = scmp.eq.s32.totalorder %s21, 0
      %p119 = por %p117, %p118
      %p120 = scmp.ne.s32.totalorder %s108, %s109
      %p121 = scmp.eq.s32.totalorder %s22, 1
      %p122 = por %p120, %p121
      %p124 = scmp.ne.s32.totalorder %s109, %s123
      %p125 = scmp.eq.s32.totalorder %s22, 0
      %p126 = por %p124, %p125
      %s128 = sadd.s32 %s127, 1
      %p131 = scmp.eq.s32.totalorder %s16, 1
      %p132 = scmp.ne.s32.totalorder %s127, %s129
      %p133 = scmp.eq.s32.totalorder %s16, 0
      %p134 = por %p132, %p133
      %p135 = scmp.ne.s32.totalorder %s127, %s129
      %p136 = scmp.eq.s32.totalorder %s21, 1
      %p137 = por %p135, %p136
      %p138 = scmp.ne.s32.totalorder %s129, %s130
      %p139 = scmp.eq.s32.totalorder %s21, 0
      %p140 = por %p138, %p139
      %p141 = scmp.ne.s32.totalorder %s129, %s130
      %p142 = scmp.eq.s32.totalorder %s22, 1
      %p143 = por %p141, %p142
      %p145 = scmp.ne.s32.totalorder %s130, %s144
      %p146 = scmp.eq.s32.totalorder %s22, 0
      %p147 = por %p145, %p146
      %s149 = sadd.s32 %s148, 1
      %p152 = scmp.eq.s32.totalorder %s16, 1
      %p153 = scmp.ne.s32.totalorder %s148, %s150
      %p154 = scmp.eq.s32.totalorder %s16, 0
      %p155 = por %p153, %p154
      %p156 = scmp.ne.s32.totalorder %s148, %s150
      %p157 = scmp.eq.s32.totalorder %s21, 1
      %p158 = por %p156, %p157
      %p159 = scmp.ne.s32.totalorder %s150, %s151
      %p160 = scmp.eq.s32.totalorder %s21, 0
      %p161 = por %p159, %p160
      %p162 = scmp.ne.s32.totalorder %s150, %s151
      %p163 = scmp.eq.s32.totalorder %s22, 1
      %p164 = por %p162, %p163
      %p166 = scmp.ne.s32.totalorder %s151, %s165
      %p167 = scmp.eq.s32.totalorder %s22, 0
      %p168 = por %p166, %p167
      %s170 = sadd.s32 %s169, 1
      %p173 = scmp.eq.s32.totalorder %s16, 1
      %p174 = scmp.ne.s32.totalorder %s169, %s171
      %p175 = scmp.eq.s32.totalorder %s16, 0
      %p176 = por %p174, %p175
      %p177 = scmp.ne.s32.totalorder %s169, %s171
      %p178 = scmp.eq.s32.totalorder %s21, 1
      %p179 = por %p177, %p178
      %p180 = scmp.ne.s32.totalorder %s171, %s172
      %p181 = scmp.eq.s32.totalorder %s21, 0
      %p182 = por %p180, %p181
      %p183 = scmp.ne.s32.totalorder %s171, %s172
      %p184 = scmp.eq.s32.totalorder %s22, 1
      %p185 = por %p183, %p184
      %p187 = scmp.ne.s32.totalorder %s172, %s186
      %p188 = scmp.eq.s32.totalorder %s22, 0
      %p189 = por %p187, %p188
      %s190 = ssub.s32 %s23, %s35
      %s191 = ssub.s32 %s24, %s31
      %s192 = sor.u32 %s190, %s191
      %p193 = scmp.eq.s32.totalorder %s192, 0
      %s195 = sadd.s32 %s194, 1
      %s196 = scalar_select %p193, %s194, %s195
      %p199 = pneg %p193
      %p200 = scmp.eq.s32.totalorder %s16, 1
      %p201 = por %p199, %p200
      %p202 = scmp.ne.s32.totalorder %s194, %s197
      %p203 = scmp.eq.s32.totalorder %s16, 0
      %p204 = por %p202, %p203
      %p205 = scmp.ne.s32.totalorder %s194, %s197
      %p206 = scmp.eq.s32.totalorder %s21, 1
      %p207 = por %p205, %p206
      %p208 = scmp.ne.s32.totalorder %s197, %s198
      %p209 = scmp.eq.s32.totalorder %s21, 0
      %p210 = por %p208, %p209
      %p211 = scmp.ne.s32.totalorder %s197, %s198
      %p212 = scmp.eq.s32.totalorder %s22, 1
      %p213 = por %p211, %p212
      %p215 = scmp.ne.s32.totalorder %s198, %s214
      %p216 = scmp.eq.s32.totalorder %s22, 0
      %p217 = por %p215, %p216
      %p218 = scmp.le.s32.totalorder 1, %s16
      %p219 = scmp.lt.s32.totalorder %s16, 3
      %p220 = pnand %p218, %p219
      %p221 = pneg %p220
      // Predicated region
      $region9: #{tpu_custom_call.1} parent=5 // pred_check
        _
      $region10: #{tpu_custom_call.1} parent=5 // pred_check_branch
        %223 = sbr.rel (%p220) target = $region12
      $region11: #{tpu_custom_call.1} parent=5 // pred_region
        %s224 = ssub.s32 %s16, 1
        // Predicated region
        $region13: #{tpu_custom_call.1} parent=11 // pred_check
          %p225 = pneg %p77
        $region14: #{tpu_custom_call.1} parent=11 // pred_check_branch
          %227 = sbr.rel (%p225) target = $region16
        $region15: #{tpu_custom_call.1} parent=11 // pred_region
          _
        $region16: #{tpu_custom_call.1} parent=11 // pred_fallthru
          _
        // Predicated region
        $region17: #{tpu_custom_call.1} parent=11 // pred_check
          %p228 = pneg %p98
        $region18: #{tpu_custom_call.1} parent=11 // pred_check_branch
          %230 = sbr.rel (%p228) target = $region20
        $region19: #{tpu_custom_call.1} parent=11 // pred_region
          _
        $region20: #{tpu_custom_call.1} parent=11 // pred_fallthru
          _
        // Predicated region
        $region21: #{tpu_custom_call.1} parent=11 // pred_check
          %p231 = pneg %p119
        $region22: #{tpu_custom_call.1} parent=11 // pred_check_branch
          %233 = sbr.rel (%p231) target = $region24
        $region23: #{tpu_custom_call.1} parent=11 // pred_region
          _
        $region24: #{tpu_custom_call.1} parent=11 // pred_fallthru
          _
        // Predicated region
        $region25: #{tpu_custom_call.1} parent=11 // pred_check
          %p234 = pneg %p140
        $region26: #{tpu_custom_call.1} parent=11 // pred_check_branch
          %236 = sbr.rel (%p234) target = $region28
        $region27: #{tpu_custom_call.1} parent=11 // pred_region
          _
        $region28: #{tpu_custom_call.1} parent=11 // pred_fallthru
          _
        // Predicated region
        $region29: #{tpu_custom_call.1} parent=11 // pred_check
          %p237 = pneg %p161
        $region30: #{tpu_custom_call.1} parent=11 // pred_check_branch
          %239 = sbr.rel (%p237) target = $region32
        $region31: #{tpu_custom_call.1} parent=11 // pred_region
          _
        $region32: #{tpu_custom_call.1} parent=11 // pred_fallthru
          _
        // Predicated region
        $region33: #{tpu_custom_call.1} parent=11 // pred_check
          %p240 = pneg %p182
        $region34: #{tpu_custom_call.1} parent=11 // pred_check_branch
          %242 = sbr.rel (%p240) target = $region36
        $region35: #{tpu_custom_call.1} parent=11 // pred_region
          _
        $region36: #{tpu_custom_call.1} parent=11 // pred_fallthru
          _
      $region12: #{tpu_custom_call.1} parent=5 // pred_fallthru
        _
      %p243 = scmp.lt.s32.totalorder %s16, 2
      // Predicated region
      $region37: #{tpu_custom_call.1} parent=5 // pred_check
        %p244 = pneg %p243
      $region38: #{tpu_custom_call.1} parent=5 // pred_check_branch
        %246 = sbr.rel (%p244) target = $region40
      $region39: #{tpu_custom_call.1} parent=5 // pred_region
        // Predicated region
        $region41: #{tpu_custom_call.1} parent=39 // pred_check
          %p247 = pneg %p50
        $region42: #{tpu_custom_call.1} parent=39 // pred_check_branch
          %249 = sbr.rel (%p247) target = $region44
        $region43: #{tpu_custom_call.1} parent=39 // pred_region
          %p250 = scmp.lt.s32.totalorder %s23, 1
          %s251 = scalar_select %p250, %s23, 1
          %p252 = scmp.lt.s32.totalorder %s24, 0
          %s253 = scalar_select %p252, %s24, 0
          %s254 = sadd.s32 %s253, %s251
          %s255 = smul.addr %s254, 8
          %s256 = scalar_lea.vmem %s0, %s255
        $region44: #{tpu_custom_call.1} parent=39 // pred_fallthru
          _
      $region40: #{tpu_custom_call.1} parent=5 // pred_fallthru
        _
      %p257 = scmp.le.s32.totalorder 1, %s16
      %p258 = scmp.lt.s32.totalorder %s16, 3
      %p259 = pnand %p257, %p258
      %p260 = pneg %p259
      // Predicated region
      $region45: #{tpu_custom_call.1} parent=5 // pred_check
        _
      $region46: #{tpu_custom_call.1} parent=5 // pred_check_branch
        %262 = sbr.rel (%p259) target = $region48
      $region47: #{tpu_custom_call.1} parent=5 // pred_region
        %s263 = ssub.s32 %s16, 1
        %p264 = scmp.lt.s32.totalorder %s25, 1
        %s265 = scalar_select %p264, %s25, 1
        %p266 = scmp.lt.s32.totalorder %s26, 0
        %s267 = scalar_select %p266, %s26, 0
        %s268 = sadd.s32 %s267, %s265
        %s269 = smul.addr %s268, 8
        %s270 = scalar_lea.vmem %s0, %s269
        %p271 = pneg %p56
        %p272 = pneg %p53
        %p273 = pneg %p77
        %p274 = pneg %p74
        %p275 = pneg %p98
        %p276 = pneg %p95
        %p277 = pneg %p119
        %p278 = pneg %p116
        %p279 = pneg %p140
        %p280 = pneg %p137
        %p281 = pneg %p161
        %p282 = pneg %p158
        %p283 = pneg %p182
        %p284 = pneg %p179
        %p285 = pneg %p210
        %p286 = pneg %p207
        %s287 = sand.u32 %s197, 1
        %s288 = scalar_lea.sflag [#allocation3], %s287
        %s289 = sand.u32 %s197, 1
        %s290 = smul.addr %s289, 8
        %s291 = scalar_lea.vmem [#allocation2], %s290
        %p292 = scmp.lt.s32.totalorder %s25, 1
        %s293 = scalar_select %p292, %s25, 1
        %p294 = scmp.lt.s32.totalorder %s26, 0
        %s295 = scalar_select %p294, %s26, 0
        %s296 = sadd.s32 %s295, %s293
        %s297 = smul.addr %s296, 8
        %s298 = scalar_lea.vmem %s0, %s297
        %v300 = vld [vmem:[%s298] sm:$0xff]
        %v301 = vld [vmem:[%s1] sm:$0xf]
        %v302 = vld [vmem:[%s1 + $0x4] sm:$0xf]
        %v303 = vpack.c.bf16 %v300, %v300
        %v304 = vld [vmem:[%s2] sm:$0xff]
        %v305 = vld [vmem:[%s2 + $0x8] sm:$0xff]
        %307 = vset.pattern.permute.xlu0 0
        %308 = vperm.xlu0 %307, %v304
        %v309 = vpop.permute.xlu0 %308
        %312 = vset.pattern.permute.xlu0 0
        %313 = vperm.xlu0 %312, %v305
        %v314 = vpop.permute.xlu0 %313
        %v318 = vunpack.c.l.b16 %v301
        %v319 = vunpack.c.l.b16 %v302
        %v320 = vpack.c.b16 %v319, %v318
        %vm321 = vcmask 64512
        %v323 = vsel %vm321, %v320, 0
        %vm325 = vcmask 1043456
        %v327 = vsel %vm325, %v303, 0
        %329 = vmatprep.subr.bf16.mxu0 0
        %330 = vmatpush1.bf16.msra.mxu0 %v327
        %331 = vmatprep.subr.bf16.mxu0 0
        %332 = vmatpush1.bf16.msra.mxu0 0
        %333 = vmatprep.subr.bf16.mxu0 0
        %334 = vmatpush1.bf16.msra.mxu0 0
        %335 = vmatprep.subr.bf16.mxu0 0
        %336 = vmatpush1.bf16.msra.mxu0 0
        %337 = vmatprep.subr.bf16.mxu0 0
        %338 = vmatpush1.bf16.msra.mxu0 0
        %339 = vmatprep.subr.bf16.mxu0 0
        %340 = vmatpush1.bf16.msra.mxu0 0
        %341 = vmatprep.subr.bf16.mxu0 0
        %342 = vmatpush1.bf16.msra.mxu0 0
        %343 = vmatprep.subr.bf16.mxu0 0
        %344 = vmatpush1.bf16.msra.mxu0 0
        %345 = vmatprep.subr.bf16.mxu0 0
        %346 = vmatpush1.bf16.msra.mxu0 0
        %347 = vmatprep.subr.bf16.mxu0 0
        %348 = vmatpush1.bf16.msra.mxu0 0
        %349 = vmatprep.subr.bf16.mxu0 0
        %350 = vmatpush1.bf16.msra.mxu0 0
        %351 = vmatprep.subr.bf16.mxu0 0
        %352 = vmatpush1.bf16.msra.mxu0 0
        %353 = vmatprep.subr.bf16.mxu0 0
        %354 = vmatpush1.bf16.msra.mxu0 0
        %355 = vmatprep.subr.bf16.mxu0 0
        %356 = vmatpush1.bf16.msra.mxu0 0
        %357 = vmatprep.subr.bf16.mxu0 0
        %358 = vmatpush1.bf16.msra.mxu0 0
        %359 = vmatprep.subr.bf16.mxu0 0
        %360 = vmatpush1.bf16.msra.mxu0 0
        %361 = vmatprep.mubr.bf16.mxu0 0
        %362 = vmatmul.mubr.bf16.gmra.mrb[0].mxu0 %v323
        %v363 = vpop.f32.mrb[0].mxu0
        %v364 = vadd.f32 %v309, %v363
        %v365 = vpop.f32.mrb[0].mxu0
        %v366 = vpop.f32.mrb[0].mxu0
        %v367 = vadd.f32 %v314, %v366
        %v368 = vpop.f32.mrb[0].mxu0
        %369 = vdwg.mxu0
        %vm370 = vcmask 261120
        %v371 = vsel %vm370, %v364, 0.0
        %v372 = vsel %vm370, %v367, 0.0
        %v373 = vadd.f32 %v371, %v372
        %v374 = vrot.slane %v373, 4
        %v375 = vadd.f32 %v373, %v374
        %v376 = vrot.slane %v375, 2
        %v377 = vadd.f32 %v375, %v376
        %v378 = vrot.slane %v377, 1
        %v379 = vadd.f32 %v377, %v378
        %v380 = vrcp.pop 16.0
        %v381 = vmul.f32 %v379, %v380
        %v382 = vsub.f32 %v364, %v381
        %v383 = vsub.f32 %v367, %v381
        %v384 = vmul.f32 %v382, %v382
        %v385 = vmul.f32 %v383, %v383
        %v386 = vsel %vm370, %v384, 0.0
        %v387 = vsel %vm370, %v385, 0.0
        %v388 = vadd.f32 %v386, %v387
        %v389 = vrot.slane %v388, 4
        %v390 = vadd.f32 %v388, %v389
        %v391 = vrot.slane %v390, 2
        %v392 = vadd.f32 %v390, %v391
        %v393 = vrot.slane %v392, 1
        %v394 = vadd.f32 %v392, %v393
        %v395 = vmul.f32 %v394, %v380
        %v396 = vadd.f32 %v395, 1e-05
        %v397 = vrsqrt.pop %v396
        %v398 = vmul.f32 %v382, %v397
        %v399 = vmul.f32 %v383, %v397
        %400 = vset.pattern.permute.xlu0 1
        %401 = vperm.xlu0 %400, %v304
        %v402 = vpop.permute.xlu0 %401
        %404 = vset.pattern.permute.xlu0 1
        %405 = vperm.xlu0 %404, %v305
        %v406 = vpop.permute.xlu0 %405
        %v408 = vmul.f32 %v398, %v402
        %v409 = vmul.f32 %v399, %v406
        %410 = vset.pattern.permute.xlu0 2
        %411 = vperm.xlu0 %410, %v304
        %v412 = vpop.permute.xlu0 %411
        %414 = vset.pattern.permute.xlu0 2
        %415 = vperm.xlu0 %414, %v305
        %v416 = vpop.permute.xlu0 %415
        %v418 = vadd.f32 %v408, %v412
        %v419 = vadd.f32 %v409, %v416
        %v420 = vmul.f32 %v418, 0.5
        %v421 = vmul.f32 %v419, 0.5
        %v422 = vmul.f32 %v418, 0.70710677
        %v423 = vmul.f32 %v419, 0.70710677
        %v424 = verf.f32.pop %v422
        %v425 = verf.f32.pop %v423
        %v426 = vadd.f32 %v424, 1.0
        %v427 = vadd.f32 %v425, 1.0
        %v428 = vmul.f32 %v420, %v426
        %v429 = vmul.f32 %v421, %v427
        %v430 = vld [vmem:[%s3] sm:$0xf]
        %v431 = vld [vmem:[%s3 + $0x4] sm:$0xf]
        %v432 = vpack.c.bf16 %v429, %v428
        %v433 = vld [vmem:[%s4] sm:$0xff]
        %v434 = vld [vmem:[%s4 + $0x8] sm:$0xff]
        %436 = vset.pattern.permute.xlu0 0
        %437 = vperm.xlu0 %436, %v433
        %v438 = vpop.permute.xlu0 %437
        %441 = vset.pattern.permute.xlu0 0
        %442 = vperm.xlu0 %441, %v434
        %v443 = vpop.permute.xlu0 %442
        %v447 = vunpack.c.l.b16 %v430
        %v448 = vunpack.c.l.b16 %v431
        %v449 = vpack.c.b16 %v448, %v447
        %vm450 = vcmask 130048
        %v452 = vsel %vm450, %v449, 0
        %454 = vmatprep.subr.bf16.mxu0 0
        %455 = vmatpush1.bf16.msra.mxu0 %v432
        %456 = vmatprep.subr.bf16.mxu0 0
        %457 = vmatpush1.bf16.msra.mxu0 0
        %458 = vmatprep.subr.bf16.mxu0 0
        %459 = vmatpush1.bf16.msra.mxu0 0
        %460 = vmatprep.subr.bf16.mxu0 0
        %461 = vmatpush1.bf16.msra.mxu0 0
        %462 = vmatprep.subr.bf16.mxu0 0
        %463 = vmatpush1.bf16.msra.mxu0 0
        %464 = vmatprep.subr.bf16.mxu0 0
        %465 = vmatpush1.bf16.msra.mxu0 0
        %466 = vmatprep.subr.bf16.mxu0 0
        %467 = vmatpush1.bf16.msra.mxu0 0
        %468 = vmatprep.subr.bf16.mxu0 0
        %469 = vmatpush1.bf16.msra.mxu0 0
        %470 = vmatprep.subr.bf16.mxu0 0
        %471 = vmatpush1.bf16.msra.mxu0 0
        %472 = vmatprep.subr.bf16.mxu0 0
        %473 = vmatpush1.bf16.msra.mxu0 0
        %474 = vmatprep.subr.bf16.mxu0 0
        %475 = vmatpush1.bf16.msra.mxu0 0
        %476 = vmatprep.subr.bf16.mxu0 0
        %477 = vmatpush1.bf16.msra.mxu0 0
        %478 = vmatprep.subr.bf16.mxu0 0
        %479 = vmatpush1.bf16.msra.mxu0 0
        %480 = vmatprep.subr.bf16.mxu0 0
        %481 = vmatpush1.bf16.msra.mxu0 0
        %482 = vmatprep.subr.bf16.mxu0 0
        %483 = vmatpush1.bf16.msra.mxu0 0
        %484 = vmatprep.subr.bf16.mxu0 0
        %485 = vmatpush1.bf16.msra.mxu0 0
        %486 = vmatprep.mubr.bf16.mxu0 0
        %487 = vmatmul.mubr.bf16.gmra.mrb[0].mxu0 %v452
        %v488 = vpop.f32.mrb[0].mxu0
        %v489 = vadd.f32 %v438, %v488
        %v490 = vpop.f32.mrb[0].mxu0
        %v491 = vpop.f32.mrb[0].mxu0
        %v492 = vadd.f32 %v443, %v491
        %v493 = vpop.f32.mrb[0].mxu0
        %494 = vdwg.mxu0
        %v495 = vsel %vm370, %v489, 0.0
        %v496 = vsel %vm370, %v492, 0.0
        %v497 = vadd.f32 %v495, %v496
        %v498 = vrot.slane %v497, 4
        %v499 = vadd.f32 %v497, %v498
        %v500 = vrot.slane %v499, 2
        %v501 = vadd.f32 %v499, %v500
        %v502 = vrot.slane %v501, 1
        %v503 = vadd.f32 %v501, %v502
        %v504 = vmul.f32 %v503, %v380
        %v505 = vsub.f32 %v489, %v504
        %v506 = vsub.f32 %v492, %v504
        %v507 = vmul.f32 %v505, %v505
        %v508 = vmul.f32 %v506, %v506
        %v509 = vsel %vm370, %v507, 0.0
        %v510 = vsel %vm370, %v508, 0.0
        %v511 = vadd.f32 %v509, %v510
        %v512 = vrot.slane %v511, 4
        %v513 = vadd.f32 %v511, %v512
        %v514 = vrot.slane %v513, 2
        %v515 = vadd.f32 %v513, %v514
        %v516 = vrot.slane %v515, 1
        %v517 = vadd.f32 %v515, %v516
        %v518 = vmul.f32 %v517, %v380
        %v519 = vadd.f32 %v518, 1e-05
        %v520 = vrsqrt.pop %v519
        %v521 = vmul.f32 %v505, %v520
        %v522 = vmul.f32 %v506, %v520
        %523 = vset.pattern.permute.xlu0 1
        %524 = vperm.xlu0 %523, %v433
        %v525 = vpop.permute.xlu0 %524
        %527 = vset.pattern.permute.xlu0 1
        %528 = vperm.xlu0 %527, %v434
        %v529 = vpop.permute.xlu0 %528
        %v531 = vmul.f32 %v521, %v525
        %v532 = vmul.f32 %v522, %v529
        %533 = vset.pattern.permute.xlu0 2
        %534 = vperm.xlu0 %533, %v433
        %v535 = vpop.permute.xlu0 %534
        %537 = vset.pattern.permute.xlu0 2
        %538 = vperm.xlu0 %537, %v434
        %v539 = vpop.permute.xlu0 %538
        %v541 = vadd.f32 %v531, %v535
        %v542 = vadd.f32 %v532, %v539
        %v543 = vmul.f32 %v541, 0.5
        %v544 = vmul.f32 %v542, 0.5
        %v545 = vmul.f32 %v541, 0.70710677
        %v546 = vmul.f32 %v542, 0.70710677
        %v547 = verf.f32.pop %v545
        %v548 = verf.f32.pop %v546
        %v549 = vadd.f32 %v547, 1.0
        %v550 = vadd.f32 %v548, 1.0
        %v551 = vmul.f32 %v543, %v549
        %v552 = vmul.f32 %v544, %v550
        %v553 = vld [vmem:[%s5] sm:$0xf]
        %v554 = vpack.c.bf16 %v552, %v551
        %v555 = vld [vmem:[%s6] sm:$0xff]
        %557 = vset.pattern.permute.xlu0 0
        %558 = vperm.xlu0 %557, %v555
        %v559 = vpop.permute.xlu0 %558
        %v562 = vsel %vm450, %v553, 0
        %564 = vmatprep.subr.bf16.mxu0 0
        %565 = vmatpush1.bf16.msra.mxu0 %v554
        %566 = vmatprep.subr.bf16.mxu0 0
        %567 = vmatpush1.bf16.msra.mxu0 0
        %568 = vmatprep.subr.bf16.mxu0 0
        %569 = vmatpush1.bf16.msra.mxu0 0
        %570 = vmatprep.subr.bf16.mxu0 0
        %571 = vmatpush1.bf16.msra.mxu0 0
        %572 = vmatprep.subr.bf16.mxu0 0
        %573 = vmatpush1.bf16.msra.mxu0 0
        %574 = vmatprep.subr.bf16.mxu0 0
        %575 = vmatpush1.bf16.msra.mxu0 0
        %576 = vmatprep.subr.bf16.mxu0 0
        %577 = vmatpush1.bf16.msra.mxu0 0
        %578 = vmatprep.subr.bf16.mxu0 0
        %579 = vmatpush1.bf16.msra.mxu0 0
        %580 = vmatprep.subr.bf16.mxu0 0
        %581 = vmatpush1.bf16.msra.mxu0 0
        %582 = vmatprep.subr.bf16.mxu0 0
        %583 = vmatpush1.bf16.msra.mxu0 0
        %584 = vmatprep.subr.bf16.mxu0 0
        %585 = vmatpush1.bf16.msra.mxu0 0
        %586 = vmatprep.subr.bf16.mxu0 0
        %587 = vmatpush1.bf16.msra.mxu0 0
        %588 = vmatprep.subr.bf16.mxu0 0
        %589 = vmatpush1.bf16.msra.mxu0 0
        %590 = vmatprep.subr.bf16.mxu0 0
        %591 = vmatpush1.bf16.msra.mxu0 0
        %592 = vmatprep.subr.bf16.mxu0 0
        %593 = vmatpush1.bf16.msra.mxu0 0
        %594 = vmatprep.subr.bf16.mxu0 0
        %595 = vmatpush1.bf16.msra.mxu0 0
        %596 = vmatprep.mubr.bf16.mxu0 0
        %597 = vmatmul.mubr.bf16.gmra.mrb[0].mxu0 %v562
        %v598 = vpop.f32.mrb[0].mxu0
        %v599 = vadd.f32 %v559, %v598
        %v600 = vpop.f32.mrb[0].mxu0
        %v601 = vpop.f32.mrb[0].mxu0
        %v602 = vpop.f32.mrb[0].mxu0
        %603 = vdwg.mxu0
        %v604 = vsel %vm370, %v599, 0.0
        %v605 = vrot.slane %v604, 4
        %v606 = vadd.f32 %v604, %v605
        %v607 = vrot.slane %v606, 2
        %v608 = vadd.f32 %v606, %v607
        %v609 = vrot.slane %v608, 1
        %v610 = vadd.f32 %v608, %v609
        %v611 = vrcp.pop 8.0
        %v612 = vmul.f32 %v610, %v611
        %v613 = vsub.f32 %v599, %v612
        %v614 = vmul.f32 %v613, %v613
        %v615 = vsel %vm370, %v614, 0.0
        %v616 = vrot.slane %v615, 4
        %v617 = vadd.f32 %v615, %v616
        %v618 = vrot.slane %v617, 2
        %v619 = vadd.f32 %v617, %v618
        %v620 = vrot.slane %v619, 1
        %v621 = vadd.f32 %v619, %v620
        %v622 = vmul.f32 %v621, %v611
        %v623 = vadd.f32 %v622, 1e-05
        %v624 = vrsqrt.pop %v623
        %v625 = vmul.f32 %v613, %v624
        %626 = vset.pattern.permute.xlu0 1
        %627 = vperm.xlu0 %626, %v555
        %v628 = vpop.permute.xlu0 %627
        %v630 = vmul.f32 %v625, %v628
        %631 = vset.pattern.permute.xlu0 2
        %632 = vperm.xlu0 %631, %v555
        %v633 = vpop.permute.xlu0 %632
        %v635 = vadd.f32 %v630, %v633
        %v636 = vadd.f32 %v635, %v300
        %637 = vst.msk [vmem:[%s291] sm:$0xff] %vm370, %v636
        %s638 = sand.u32 %s197, 1
        %s639 = scalar_lea.sflag [#allocation3], %s638
        %s640 = sand.u32 %s197, 1
        %s641 = smul.addr %s640, 8
        %s642 = scalar_lea.vmem [#allocation2], %s641
        // Predicated region
        $region49: #{tpu_custom_call.1} parent=47 // pred_check
          %p643 = pneg %p207
        $region50: #{tpu_custom_call.1} parent=47 // pred_check_branch
          %645 = sbr.rel (%p643) target = $region52
        $region51: #{tpu_custom_call.1} parent=47 // pred_region
          %s647 = ssub.s32 128, 128
          %648 = vsyncadd %s639, %s647
          %s649 = sadd.s32 %s26, %s25
          %s650 = smul.addr %s649, 128
          %s651 = scalar_lea.hbm %s7, %s650
          %s653 = sshll.u32 %s642, 4
          %s654 = int_to_ptr.vmem [resolvable:$true] %s653
          %656 = dma.vmem_to_hbm [thread:$0]  %s654, 128, %s651, %s639
        $region52: #{tpu_custom_call.1} parent=47 // pred_fallthru
          _
      $region48: #{tpu_custom_call.1} parent=5 // pred_fallthru
        _
      %p657 = scmp.le.s32.totalorder 2, %s16
      // Predicated region
      $region53: #{tpu_custom_call.1} parent=5 // pred_check
        %p658 = pneg %p657
      $region54: #{tpu_custom_call.1} parent=5 // pred_check_branch
        %660 = sbr.rel (%p658) target = $region56
      $region55: #{tpu_custom_call.1} parent=5 // pred_region
        %s661 = ssub.s32 %s16, 2
        // Predicated region
        $region57: #{tpu_custom_call.1} parent=55 // pred_check
          %p662 = pneg %p213
        $region58: #{tpu_custom_call.1} parent=55 // pred_check_branch
          %664 = sbr.rel (%p662) target = $region60
        $region59: #{tpu_custom_call.1} parent=55 // pred_region
          %s665 = sand.u32 %s198, 1
          %s666 = scalar_lea.sflag [#allocation3], %s665
          %s667 = sand.u32 %s198, 1
          %s668 = smul.addr %s667, 8
          %s669 = scalar_lea.vmem [#allocation2], %s668
          %670 = dma.done %s666, 128
        $region60: #{tpu_custom_call.1} parent=55 // pred_fallthru
          _
      $region56: #{tpu_custom_call.1} parent=5 // pred_fallthru
        _
    $region6: #{tpu_custom_call.1} parent=1 // loop_footer
      %s20 = sadd.s32 1, %s16
    $region7: #{tpu_custom_call.1} parent=1 // loop_footer_branch
      %15 = sbr.rel target = $region3
    $region8: #{tpu_custom_call.1} parent=1 // loop_exit
      _
    %671 = vsyncpa [#allocation3], 1
    %s672 = scalar_lea.sflag [#allocation3], 1
    %673 = vsyncpa %s672, 1

</llo_original>
